<compile_context>
chip_gen: v7x
topology: tpu7x:2x2x1
jax: 0.10.0
libtpu: 0.0.40
codegen_flags: <defaults>
</compile_context>

<pallas_src>
import math

import numpy as np
import jax
import jax.numpy as jnp
from jax.experimental import pallas as pl
from jax.experimental.pallas import tpu as pltpu

# ---------------- model hyper-parameters (small, consistent with the module) --
B = 4               # batch
D = 32              # graph size (nodes), must be divisible by 16
CL1_F, CL1_K = 8, 5
CL2_F, CL2_K = 16, 5
FC1_F = 32
FC2_F = 5
V2 = D // 4         # coarse graph size after pool1
V3 = D // 16        # graph size after pool2
FC1Fin = CL2_F * V3

LANES = 128
assert D <= LANES and B * CL2_F <= LANES and B * FC1_F <= LANES


def _r8(n):          # round rows up to a sublane multiple so every slice is aligned
    return -(-n // 8) * 8


# --------------- parameter-slab row offsets (all sublane-aligned) -------------
OFF_L1 = 0                                   # (D, D)
OFF_L2 = OFF_L1 + _r8(D)                     # (V2, V2)
OFF_W1 = OFF_L2 + _r8(V2)                    # (CL1_K*B*1,     B*CL1_F)
OFF_B1 = OFF_W1 + _r8(CL1_K * B * 1)         # (1, B*CL1_F)
OFF_W2 = OFF_B1 + _r8(1)                     # (CL2_K*B*CL1_F, B*CL2_F)
OFF_B2 = OFF_W2 + _r8(CL2_K * B * CL1_F)     # (1, B*CL2_F)
OFF_WF1 = OFF_B2 + _r8(1)                    # (V3*B*CL2_F,    B*FC1_F)
OFF_BF1 = OFF_WF1 + _r8(V3 * B * CL2_F)      # (1, B*FC1_F)
OFF_WF2 = OFF_BF1 + _r8(1)                   # (B*FC1_F,       B*FC2_F)
OFF_BF2 = OFF_WF2 + _r8(B * FC1_F)           # (1, B*FC2_F)
SLAB_ROWS = OFF_BF2 + _r8(1)                 # = 512 rows -> 256 KiB f32 slab


# ---------------- node permutations that make the pools reshape-free ----------
def _pool_perm(V, out_order):
    """Permutation p (len V): if row i of the activations holds original node
    p[i], then graph_max_pool(p=4) == elementwise max of the 4 contiguous row
    slabs [0:V/4], [V/4:V/2], ..., and the pooled rows come out in coarse-node
    order `out_order`."""
    q = V // 4
    p = np.zeros(V, dtype=np.int64)
    for i in range(q):
        for j in range(4):
            p[i + j * q] = 4 * int(out_order[i]) + j
    return p


PERM2 = _pool_perm(V2, np.arange(V3))   # coarse order used between the two pools
PERM1 = _pool_perm(D, PERM2)            # fine order fed to conv1 (output of pool2
                                        #   ends up back in the ORIGINAL order)


# ----------------------------- fused Pallas kernel ----------------------------
def lenet5_fused_kernel(x_ref, p_ref, o_ref, xs1_ref, xs2_ref):
    """Whole Graph_ConvNet_LeNet5 forward pass in one grid-less kernel.

    x_ref  : (D, B)          input signal, node-permuted by PERM1, pre-transposed
    p_ref  : (SLAB_ROWS,128) packed constants (L1', L2', all weights / biases)
    o_ref  : (1, B*FC2_F)    logits, col = b*FC2_F + c  (one contiguous row store)
    xs1_ref: (D,  CL1_K*B)        scratch: stacked Chebyshev terms, conv1
    xs2_ref: (V2, CL2_K*B*CL1_F)  scratch: stacked Chebyshev terms, conv2
    Activations live as (V, B*F) slabs with col = b*F + f throughout.
    """

    def cheby_stack(L, x0, xs_ref, w, K):
        """Write [T_0(L)x, ..., T_{K-1}(L)x] into xs_ref at static lane offsets
        (so the per-k linear collapses into ONE MXU contraction afterwards)."""
        xs_ref[:, 0:w] = x0
        x1 = jnp.dot(L, x0, preferred_element_type=jnp.float32)
        xs_ref[:, w:2 * w] = x1
        xm2, xm1 = x0, x1
        for k in range(2, K):
            xk = 2.0 * jnp.dot(L, xm1, preferred_element_type=jnp.float32) - xm2
            xs_ref[:, k * w:(k + 1) * w] = xk
            xm2, xm1 = xm1, xk

    def pool4(y):
        """graph_max_pool(p=4): node order was permuted host-side, so the pool is
        an elementwise max of 4 contiguous row slabs (pure VPU, no relayout)."""
        q = y.shape[0] // 4
        return jnp.maximum(jnp.maximum(y[0:q], y[q:2 * q]),
                           jnp.maximum(y[2 * q:3 * q], y[3 * q:4 * q]))

    # ---- conv1 (K=5 Chebyshev) + bias + ReLU + pool ---------------------------
    L1 = p_ref[OFF_L1:OFF_L1 + D, 0:D]                               # (D, D)
    cheby_stack(L1, x_ref[...], xs1_ref, B, CL1_K)                   # Fin = 1
    y = jnp.dot(xs1_ref[...],
                p_ref[OFF_W1:OFF_W1 + CL1_K * B, 0:B * CL1_F],
                preferred_element_type=jnp.float32)
    y = jnp.maximum(y + p_ref[OFF_B1:OFF_B1 + 1, 0:B * CL1_F], 0.0)  # (D, B*CL1_F)
    y = pool4(y)                                                     # (V2, B*CL1_F)

    # ---- conv2 (K=5 Chebyshev) + bias + ReLU + pool ---------------------------
    L2 = p_ref[OFF_L2:OFF_L2 + V2, 0:V2]                             # (V2, V2)
    cheby_stack(L2, y, xs2_ref, B * CL1_F, CL2_K)
    y = jnp.dot(xs2_ref[...],
                p_ref[OFF_W2:OFF_W2 + CL2_K * B * CL1_F, 0:B * CL2_F],
                preferred_element_type=jnp.float32)
    y = jnp.maximum(y + p_ref[OFF_B2:OFF_B2 + 1, 0:B * CL2_F], 0.0)  # (V2, B*CL2_F)
    y = pool4(y)                                                     # (V3, B*CL2_F)

    # ---- fc1 + ReLU: flatten (view(-1, FC1Fin)) folded into per-node block-diag
    h = p_ref[OFF_BF1:OFF_BF1 + 1, 0:B * FC1_F]                      # start from bias
    for v in range(V3):
        row0 = OFF_WF1 + v * B * CL2_F
        h = h + jnp.dot(y[v:v + 1, :],
                        p_ref[row0:row0 + B * CL2_F, 0:B * FC1_F],
                        preferred_element_type=jnp.float32)
    h = jnp.maximum(h, 0.0)                                          # (1, B*FC1_F)
    # TODO(synk): nn.Dropout(d) in the reference is treated as identity (inference).

    # ---- fc2 -> single contiguous row store -----------------------------------
    o_ref[...] = (jnp.dot(h, p_ref[OFF_WF2:OFF_WF2 + B * FC1_F, 0:B * FC2_F],
                          preferred_element_type=jnp.float32)
                  + p_ref[OFF_BF2:OFF_BF2 + 1, 0:B * FC2_F])


# ----------------------------- pallas_call glue -------------------------------
@jax.jit
def forward(x, const_slab):
    """x: (B, D) graph signal in the ORIGINAL node order."""
    xp = x[:, PERM1].T                      # permute + transpose OUTSIDE the kernel
    out = pl.pallas_call(
        lenet5_fused_kernel,
        out_shape=jax.ShapeDtypeStruct((1, B * FC2_F), jnp.float32),
        in_specs=[pl.BlockSpec(memory_space=pltpu.MemorySpace.VMEM),
                  pl.BlockSpec(memory_space=pltpu.MemorySpace.VMEM)],
        out_specs=pl.BlockSpec(memory_space=pltpu.MemorySpace.VMEM),
        scratch_shapes=[pltpu.VMEM((D, CL1_K * B), jnp.float32),
                        pltpu.VMEM((V2, CL2_K * B * CL1_F), jnp.float32)],
    )(xp, const_slab)
    return out.reshape(B, FC2_F)


# --------------------- host-side constant packing (runs once) -----------------
def _stack_cheby_weight(W, Fin, K, Fout):
    """nn.Linear weight (Fout, Fin*K) [col = f*K + k]  ->  (K*B*Fin, B*Fout)
    stacked block-diagonal weight: row = k*B*Fin + b*Fin + f, col = b'*Fout + o.
    NOTE: O(B^2) bytes — fine at B=4, revisit if batch is scaled (v7x: 64 MiB VMEM)."""
    Wk = jnp.transpose(W.reshape(Fout, Fin, K), (2, 1, 0))       # [k, f, o]
    eye = jnp.eye(B, dtype=jnp.float32)
    Wbd = jnp.einsum('kfo,bc->kbfco', Wk, eye)                   # [k, b, f, b', o]
    return Wbd.reshape(K * B * Fin, B * Fout)


def _stack_fc1_weight(Wf1):
    """fc1 weight (FC1_F, FC1Fin) [col = v*CL2_F + o]  ->  (V3*B*CL2_F, B*FC1_F)
    per-node block-diagonal form (the torch flatten permutation disappears)."""
    Wv = jnp.transpose(Wf1.reshape(FC1_F, V3, CL2_F), (1, 2, 0))  # [v, o, f]
    eye = jnp.eye(B, dtype=jnp.float32)
    Wbd = jnp.einsum('vof,bc->vbocf', Wv, eye)                    # [v, b, o, b', f]
    return Wbd.reshape(V3 * B * CL2_F, B * FC1_F)


def _stack_fc2_weight(Wf2):
    """fc2 weight (FC2_F, FC1_F) -> (B*FC1_F, B*FC2_F) block-diagonal."""
    eye = jnp.eye(B, dtype=jnp.float32)
    Wbd = jnp.einsum('cf,bd->bfdc', Wf2, eye)                     # [b, f, b', c]
    return Wbd.reshape(B * FC1_F, B * FC2_F)


def pack_constants(L1, L2, params):
    """Permute the (already rescaled) Laplacians for reshape-free pooling and pack
    every constant the kernel needs into ONE lane-padded f32 slab -> 1 entry DMA."""
    W1, b1, W2, b2, Wf1, bf1, Wf2, bf2 = params
    blocks = {
        OFF_L1:  L1[PERM1][:, PERM1],
        OFF_L2:  L2[PERM2][:, PERM2],
        OFF_W1:  _stack_cheby_weight(W1, 1, CL1_K, CL1_F),
        OFF_B1:  jnp.tile(b1, B)[None, :],
        OFF_W2:  _stack_cheby_weight(W2, CL1_F, CL2_K, CL2_F),
        OFF_B2:  jnp.tile(b2, B)[None, :],
        OFF_WF1: _stack_fc1_weight(Wf1),
        OFF_BF1: jnp.tile(bf1, B)[None, :],
        OFF_WF2: _stack_fc2_weight(Wf2),
        OFF_BF2: jnp.tile(bf2, B)[None, :],
    }
    slab = jnp.zeros((SLAB_ROWS, LANES), jnp.float32)
    for off, arr in blocks.items():
        r, c = arr.shape
        slab = slab.at[off:off + r, 0:c].set(arr.astype(jnp.float32))
    return slab


# ----------------------------- parameter setup --------------------------------
def _uniform(key, shape, fin, fout):
    scale = math.sqrt(2.0 / (fin + fout))
    return jax.random.uniform(key, shape, minval=-scale, maxval=scale,
                              dtype=jnp.float32)


def init_params(key):
    """Parameters in the original PyTorch layouts (weight = (out, in), zero bias)."""
    k1, k2, k3, k4 = jax.random.split(key, 4)
    W1 = _uniform(k1, (CL1_F, CL1_K), CL1_K, CL1_F)
    b1 = jnp.zeros((CL1_F,), jnp.float32)
    W2 = _uniform(k2, (CL2_F, CL2_K * CL1_F), CL2_K * CL1_F, CL2_F)
    b2 = jnp.zeros((CL2_F,), jnp.float32)
    Wf1 = _uniform(k3, (FC1_F, FC1Fin), FC1Fin, FC1_F)
    bf1 = jnp.zeros((FC1_F,), jnp.float32)
    Wf2 = _uniform(k4, (FC2_F, FC1_F), FC1_F, FC2_F)
    bf2 = jnp.zeros((FC2_F,), jnp.float32)
    return (W1, b1, W2, b2, Wf1, bf1, Wf2, bf2)


def make_rescaled_laplacian(key, V):
    """Synthetic symmetric normalized Laplacian, rescaled as 2L/lmax - I.
    lmax is taken as 2.0 (upper bound); the PyTorch pipeline computes exact lmax
    host-side with scipy — a harness choice, not a kernel concern."""
    a = jax.random.uniform(key, (V, V), dtype=jnp.float32)
    A = 0.5 * (a + a.T) * (1.0 - jnp.eye(V, dtype=jnp.float32))
    deg = jnp.maximum(A.sum(axis=1), 1e-6)
    dinv = 1.0 / jnp.sqrt(deg)
    Lap = jnp.eye(V, dtype=jnp.float32) - dinv[:, None] * A * dinv[None, :]
    return (2.0 / 2.0) * Lap - jnp.eye(V, dtype=jnp.float32)


# --------------------- pure-JAX reference (mirrors the PyTorch forward) -------
def reference_forward(x, L1, L2, params):
    W1, b1, W2, b2, Wf1, bf1, Wf2, bf2 = params

    def cheby(xin, L, W, b, K, Fout):
        Bb, V, Fin = xin.shape
        x0 = jnp.transpose(xin, (1, 2, 0)).reshape(V, Fin * Bb)
        terms = [x0]
        if K > 1:
            x1 = L @ x0
            terms.append(x1)
            for _ in range(2, K):
                x2 = 2.0 * (L @ x1) - x0
                terms.append(x2)
                x0, x1 = x1, x2
        xk = jnp.stack(terms, 0).reshape(K, V, Fin, Bb)
        xk = jnp.transpose(xk, (3, 1, 2, 0)).reshape(Bb * V, Fin * K)
        y = xk @ W.T + b
        return y.reshape(Bb, V, Fout)

    def pool4(y):
        Bb, V, F = y.shape
        return y.reshape(Bb, V // 4, 4, F).max(axis=2)

    y = x[:, :, None]                                         # (B, D, 1)
    y = pool4(jnp.maximum(cheby(y, L1, W1, b1, CL1_K, CL1_F), 0.0))
    y = pool4(jnp.maximum(cheby(y, L2, W2, b2, CL2_K, CL2_F), 0.0))
    y = y.reshape(-1, FC1Fin)
    y = jnp.maximum(y @ Wf1.T + bf1, 0.0)
    return y @ Wf2.T + bf2


# ----------------------------- main --------------------------------------------
if __name__ == "__main__":
    key = jax.random.PRNGKey(0)
    k_x, k_p, k_l1, k_l2 = jax.random.split(key, 4)

    x = jax.random.normal(k_x, (B, D), dtype=jnp.float32)     # input signal on graph
    params = init_params(k_p)
    L1 = make_rescaled_laplacian(k_l1, D)                     # fine graph
    L2 = make_rescaled_laplacian(k_l2, V2)                    # coarsened graph

    const_slab = jax.block_until_ready(pack_constants(L1, L2, params))

    y = forward(x, const_slab)
    jax.block_until_ready(y)
    assert y.shape == (B, FC2_F) and y.dtype == jnp.float32

    # Correctness check vs. a straightforward JAX port of the PyTorch forward.
    # Tolerance is loose because TPU's default matmul precision truncates f32
    # operands to bf16 and the two pipelines use different (equivalent)
    # contraction orders; a layout/permutation bug would produce O(1) errors.
    y_ref = reference_forward(x, L1, L2, params)
    err = float(jnp.max(jnp.abs(y - y_ref)))
    assert err < 5e-2, f"kernel mismatch vs reference: max abs err {err}"

    print("KERNEL_OK")
</pallas_src>

<mosaic_0001>
module attributes {stable_mosaic.version = 11 : i64} {
  func.func @lenet5_fused_kernel(%arg0: memref<32x4xf32, #tpu.memory_space<vmem>>, %arg1: memref<512x128xf32, #tpu.memory_space<vmem>>, %arg2: memref<1x20xf32, #tpu.memory_space<vmem>>, %arg3: memref<32x20xf32, #tpu.memory_space<vmem>>, %arg4: memref<8x160xf32, #tpu.memory_space<vmem>>) attributes {dimension_semantics = [], scalar_prefetch = 0 : i64, scratch_operands = 2 : i64, tpu.core_type = #tpu.core_type<tc>} {
    %c0 = arith.constant 0 : index
    %c0_0 = arith.constant 0 : index
    %0 = vector.load %arg1[%c0, %c0_0] : memref<512x128xf32, #tpu.memory_space<vmem>>, vector<32x32xf32>
    %c0_1 = arith.constant 0 : index
    %c0_2 = arith.constant 0 : index
    %1 = vector.load %arg0[%c0_1, %c0_2] : memref<32x4xf32, #tpu.memory_space<vmem>>, vector<32x4xf32>
    %c0_3 = arith.constant 0 : index
    %c0_4 = arith.constant 0 : index
    %2 = vector.load %arg3[%c0_3, %c0_4] : memref<32x20xf32, #tpu.memory_space<vmem>>, vector<32x4xf32>
    tpu.vector_store %arg3[%c0_3, %c0_4], %1 {strides = array<i32>} : memref<32x20xf32, #tpu.memory_space<vmem>>, vector<32x4xf32>,
    %cst = arith.constant dense<0.000000e+00> : vector<32x4xf32>
    %3 = tpu.matmul %0, %1, %cst {dimension_numbers = #tpu.dot_dimension_numbers<[1], [0], [0], [1], [0, 0, 1, 1], [], []>} : vector<32x32xf32>, vector<32x4xf32>, vector<32x4xf32> -> vector<32x4xf32>
    %c0_5 = arith.constant 0 : index
    %c4 = arith.constant 4 : index
    %4 = vector.load %arg3[%c0_5, %c4] : memref<32x20xf32, #tpu.memory_space<vmem>>, vector<32x4xf32>
    tpu.vector_store %arg3[%c0_5, %c4], %3 {strides = array<i32>} : memref<32x20xf32, #tpu.memory_space<vmem>>, vector<32x4xf32>,
    %cst_6 = arith.constant dense<0.000000e+00> : vector<32x4xf32>
    %5 = tpu.matmul %0, %3, %cst_6 {dimension_numbers = #tpu.dot_dimension_numbers<[1], [0], [0], [1], [0, 0, 1, 1], [], []>} : vector<32x32xf32>, vector<32x4xf32>, vector<32x4xf32> -> vector<32x4xf32>
    %cst_7 = arith.constant 2.000000e+00 : f32
    %6 = vector.broadcast %cst_7 : f32 to vector<32x4xf32>
    %7 = arith.mulf %6, %5 : vector<32x4xf32>
    %8 = arith.subf %7, %1 : vector<32x4xf32>
    %c0_8 = arith.constant 0 : index
    %c8 = arith.constant 8 : index
    %9 = vector.load %arg3[%c0_8, %c8] : memref<32x20xf32, #tpu.memory_space<vmem>>, vector<32x4xf32>
    tpu.vector_store %arg3[%c0_8, %c8], %8 {strides = array<i32>} : memref<32x20xf32, #tpu.memory_space<vmem>>, vector<32x4xf32>,
    %cst_9 = arith.constant dense<0.000000e+00> : vector<32x4xf32>
    %10 = tpu.matmul %0, %8, %cst_9 {dimension_numbers = #tpu.dot_dimension_numbers<[1], [0], [0], [1], [0, 0, 1, 1], [], []>} : vector<32x32xf32>, vector<32x4xf32>, vector<32x4xf32> -> vector<32x4xf32>
    %cst_10 = arith.constant 2.000000e+00 : f32
    %11 = vector.broadcast %cst_10 : f32 to vector<32x4xf32>
    %12 = arith.mulf %11, %10 : vector<32x4xf32>
    %13 = arith.subf %12, %3 : vector<32x4xf32>
    %c0_11 = arith.constant 0 : index
    %c12 = arith.constant 12 : index
    %14 = vector.load %arg3[%c0_11, %c12] : memref<32x20xf32, #tpu.memory_space<vmem>>, vector<32x4xf32>
    tpu.vector_store %arg3[%c0_11, %c12], %13 {strides = array<i32>} : memref<32x20xf32, #tpu.memory_space<vmem>>, vector<32x4xf32>,
    %cst_12 = arith.constant dense<0.000000e+00> : vector<32x4xf32>
    %15 = tpu.matmul %0, %13, %cst_12 {dimension_numbers = #tpu.dot_dimension_numbers<[1], [0], [0], [1], [0, 0, 1, 1], [], []>} : vector<32x32xf32>, vector<32x4xf32>, vector<32x4xf32> -> vector<32x4xf32>
    %cst_13 = arith.constant 2.000000e+00 : f32
    %16 = vector.broadcast %cst_13 : f32 to vector<32x4xf32>
    %17 = arith.mulf %16, %15 : vector<32x4xf32>
    %18 = arith.subf %17, %8 : vector<32x4xf32>
    %c0_14 = arith.constant 0 : index
    %c16 = arith.constant 16 : index
    %19 = vector.load %arg3[%c0_14, %c16] : memref<32x20xf32, #tpu.memory_space<vmem>>, vector<32x4xf32>
    tpu.vector_store %arg3[%c0_14, %c16], %18 {strides = array<i32>} : memref<32x20xf32, #tpu.memory_space<vmem>>, vector<32x4xf32>,
    %c0_15 = arith.constant 0 : index
    %c0_16 = arith.constant 0 : index
    %20 = vector.load %arg3[%c0_15, %c0_16] : memref<32x20xf32, #tpu.memory_space<vmem>>, vector<32x20xf32>
    %c40 = arith.constant 40 : index
    %c0_17 = arith.constant 0 : index
    %21 = vector.load %arg1[%c40, %c0_17] : memref<512x128xf32, #tpu.memory_space<vmem>>, vector<20x32xf32>
    %cst_18 = arith.constant dense<0.000000e+00> : vector<32x32xf32>
    %22 = tpu.matmul %20, %21, %cst_18 {dimension_numbers = #tpu.dot_dimension_numbers<[1], [0], [0], [1], [0, 0, 1, 1], [], []>} : vector<32x20xf32>, vector<20x32xf32>, vector<32x32xf32> -> vector<32x32xf32>
    %c64 = arith.constant 64 : index
    %c0_19 = arith.constant 0 : index
    %23 = vector.load %arg1[%c64, %c0_19] : memref<512x128xf32, #tpu.memory_space<vmem>>, vector<1x32xf32>
    %24 = vector.broadcast %23 : vector<1x32xf32> to vector<32x32xf32>
    %25 = arith.addf %22, %24 : vector<32x32xf32>
    %cst_20 = arith.constant 0.000000e+00 : f32
    %26 = vector.broadcast %cst_20 : f32 to vector<32x32xf32>
    %27 = arith.maximumf %25, %26 : vector<32x32xf32>
    %28 = vector.extract_strided_slice %27 {offsets = [0, 0], sizes = [8, 32], strides = [1, 1]} : vector<32x32xf32> to vector<8x32xf32>
    %29 = vector.extract_strided_slice %27 {offsets = [8, 0], sizes = [8, 32], strides = [1, 1]} : vector<32x32xf32> to vector<8x32xf32>
    %30 = arith.maximumf %28, %29 : vector<8x32xf32>
    %31 = vector.extract_strided_slice %27 {offsets = [16, 0], sizes = [8, 32], strides = [1, 1]} : vector<32x32xf32> to vector<8x32xf32>
    %32 = vector.extract_strided_slice %27 {offsets = [24, 0], sizes = [8, 32], strides = [1, 1]} : vector<32x32xf32> to vector<8x32xf32>
    %33 = arith.maximumf %31, %32 : vector<8x32xf32>
    %34 = arith.maximumf %30, %33 : vector<8x32xf32>
    %c32 = arith.constant 32 : index
    %c0_21 = arith.constant 0 : index
    %35 = vector.load %arg1[%c32, %c0_21] : memref<512x128xf32, #tpu.memory_space<vmem>>, vector<8x8xf32>
    %c0_22 = arith.constant 0 : index
    %c0_23 = arith.constant 0 : index
    %36 = vector.load %arg4[%c0_22, %c0_23] : memref<8x160xf32, #tpu.memory_space<vmem>>, vector<8x32xf32>
    tpu.vector_store %arg4[%c0_22, %c0_23], %34 {strides = array<i32>} : memref<8x160xf32, #tpu.memory_space<vmem>>, vector<8x32xf32>,
    %cst_24 = arith.constant dense<0.000000e+00> : vector<8x32xf32>
    %37 = tpu.matmul %35, %34, %cst_24 {dimension_numbers = #tpu.dot_dimension_numbers<[1], [0], [0], [1], [0, 0, 1, 1], [], []>} : vector<8x8xf32>, vector<8x32xf32>, vector<8x32xf32> -> vector<8x32xf32>
    %c0_25 = arith.constant 0 : index
    %c32_26 = arith.constant 32 : index
    %38 = vector.load %arg4[%c0_25, %c32_26] : memref<8x160xf32, #tpu.memory_space<vmem>>, vector<8x32xf32>
    tpu.vector_store %arg4[%c0_25, %c32_26], %37 {strides = array<i32>} : memref<8x160xf32, #tpu.memory_space<vmem>>, vector<8x32xf32>,
    %cst_27 = arith.constant dense<0.000000e+00> : vector<8x32xf32>
    %39 = tpu.matmul %35, %37, %cst_27 {dimension_numbers = #tpu.dot_dimension_numbers<[1], [0], [0], [1], [0, 0, 1, 1], [], []>} : vector<8x8xf32>, vector<8x32xf32>, vector<8x32xf32> -> vector<8x32xf32>
    %cst_28 = arith.constant 2.000000e+00 : f32
    %40 = vector.broadcast %cst_28 : f32 to vector<8x32xf32>
    %41 = arith.mulf %40, %39 : vector<8x32xf32>
    %42 = arith.subf %41, %34 : vector<8x32xf32>
    %c0_29 = arith.constant 0 : index
    %c64_30 = arith.constant 64 : index
    %43 = vector.load %arg4[%c0_29, %c64_30] : memref<8x160xf32, #tpu.memory_space<vmem>>, vector<8x32xf32>
    tpu.vector_store %arg4[%c0_29, %c64_30], %42 {strides = array<i32>} : memref<8x160xf32, #tpu.memory_space<vmem>>, vector<8x32xf32>,
    %cst_31 = arith.constant dense<0.000000e+00> : vector<8x32xf32>
    %44 = tpu.matmul %35, %42, %cst_31 {dimension_numbers = #tpu.dot_dimension_numbers<[1], [0], [0], [1], [0, 0, 1, 1], [], []>} : vector<8x8xf32>, vector<8x32xf32>, vector<8x32xf32> -> vector<8x32xf32>
    %cst_32 = arith.constant 2.000000e+00 : f32
    %45 = vector.broadcast %cst_32 : f32 to vector<8x32xf32>
    %46 = arith.mulf %45, %44 : vector<8x32xf32>
    %47 = arith.subf %46, %37 : vector<8x32xf32>
    %c0_33 = arith.constant 0 : index
    %c96 = arith.constant 96 : index
    %48 = vector.load %arg4[%c0_33, %c96] : memref<8x160xf32, #tpu.memory_space<vmem>>, vector<8x32xf32>
    tpu.vector_store %arg4[%c0_33, %c96], %47 {strides = array<i32>} : memref<8x160xf32, #tpu.memory_space<vmem>>, vector<8x32xf32>,
    %cst_34 = arith.constant dense<0.000000e+00> : vector<8x32xf32>
    %49 = tpu.matmul %35, %47, %cst_34 {dimension_numbers = #tpu.dot_dimension_numbers<[1], [0], [0], [1], [0, 0, 1, 1], [], []>} : vector<8x8xf32>, vector<8x32xf32>, vector<8x32xf32> -> vector<8x32xf32>
    %cst_35 = arith.constant 2.000000e+00 : f32
    %50 = vector.broadcast %cst_35 : f32 to vector<8x32xf32>
    %51 = arith.mulf %50, %49 : vector<8x32xf32>
    %52 = arith.subf %51, %42 : vector<8x32xf32>
    %c0_36 = arith.constant 0 : index
    %c128 = arith.constant 128 : index
    %53 = vector.load %arg4[%c0_36, %c128] : memref<8x160xf32, #tpu.memory_space<vmem>>, vector<8x32xf32>
    tpu.vector_store %arg4[%c0_36, %c128], %52 {strides = array<i32>} : memref<8x160xf32, #tpu.memory_space<vmem>>, vector<8x32xf32>,
    %c0_37 = arith.constant 0 : index
    %c0_38 = arith.constant 0 : index
    %54 = vector.load %arg4[%c0_37, %c0_38] : memref<8x160xf32, #tpu.memory_space<vmem>>, vector<8x160xf32>
    %c72 = arith.constant 72 : index
    %c0_39 = arith.constant 0 : index
    %55 = vector.load %arg1[%c72, %c0_39] : memref<512x128xf32, #tpu.memory_space<vmem>>, vector<160x64xf32>
    %cst_40 = arith.constant dense<0.000000e+00> : vector<8x64xf32>
    %56 = tpu.matmul %54, %55, %cst_40 {dimension_numbers = #tpu.dot_dimension_numbers<[1], [0], [0], [1], [0, 0, 1, 1], [], []>} : vector<8x160xf32>, vector<160x64xf32>, vector<8x64xf32> -> vector<8x64xf32>
    %c232 = arith.constant 232 : index
    %c0_41 = arith.constant 0 : index
    %57 = vector.load %arg1[%c232, %c0_41] : memref<512x128xf32, #tpu.memory_space<vmem>>, vector<1x64xf32>
    %58 = vector.broadcast %57 : vector<1x64xf32> to vector<8x64xf32>
    %59 = arith.addf %56, %58 : vector<8x64xf32>
    %cst_42 = arith.constant 0.000000e+00 : f32
    %60 = vector.broadcast %cst_42 : f32 to vector<8x64xf32>
    %61 = arith.maximumf %59, %60 : vector<8x64xf32>
    %62 = vector.extract_strided_slice %61 {offsets = [0, 0], sizes = [2, 64], strides = [1, 1]} : vector<8x64xf32> to vector<2x64xf32>
    %63 = vector.extract_strided_slice %61 {offsets = [2, 0], sizes = [2, 64], strides = [1, 1]} : vector<8x64xf32> to vector<2x64xf32>
    %64 = arith.maximumf %62, %63 : vector<2x64xf32>
    %65 = vector.extract_strided_slice %61 {offsets = [4, 0], sizes = [2, 64], strides = [1, 1]} : vector<8x64xf32> to vector<2x64xf32>
    %66 = vector.extract_strided_slice %61 {offsets = [6, 0], sizes = [2, 64], strides = [1, 1]} : vector<8x64xf32> to vector<2x64xf32>
    %67 = arith.maximumf %65, %66 : vector<2x64xf32>
    %68 = arith.maximumf %64, %67 : vector<2x64xf32>
    %c368 = arith.constant 368 : index
    %c0_43 = arith.constant 0 : index
    %69 = vector.load %arg1[%c368, %c0_43] : memref<512x128xf32, #tpu.memory_space<vmem>>, vector<1x128xf32>
    %70 = vector.extract_strided_slice %68 {offsets = [0, 0], sizes = [1, 64], strides = [1, 1]} : vector<2x64xf32> to vector<1x64xf32>
    %c240 = arith.constant 240 : index
    %c0_44 = arith.constant 0 : index
    %71 = vector.load %arg1[%c240, %c0_44] : memref<512x128xf32, #tpu.memory_space<vmem>>, vector<64x128xf32>
    %cst_45 = arith.constant dense<0.000000e+00> : vector<1x128xf32>
    %72 = tpu.matmul %70, %71, %cst_45 {dimension_numbers = #tpu.dot_dimension_numbers<[1], [0], [0], [1], [0, 0, 1, 1], [], []>} : vector<1x64xf32>, vector<64x128xf32>, vector<1x128xf32> -> vector<1x128xf32>
    %73 = arith.addf %69, %72 : vector<1x128xf32>
    %74 = vector.extract_strided_slice %68 {offsets = [1, 0], sizes = [1, 64], strides = [1, 1]} : vector<2x64xf32> to vector<1x64xf32>
    %c304 = arith.constant 304 : index
    %c0_46 = arith.constant 0 : index
    %75 = vector.load %arg1[%c304, %c0_46] : memref<512x128xf32, #tpu.memory_space<vmem>>, vector<64x128xf32>
    %cst_47 = arith.constant dense<0.000000e+00> : vector<1x128xf32>
    %76 = tpu.matmul %74, %75, %cst_47 {dimension_numbers = #tpu.dot_dimension_numbers<[1], [0], [0], [1], [0, 0, 1, 1], [], []>} : vector<1x64xf32>, vector<64x128xf32>, vector<1x128xf32> -> vector<1x128xf32>
    %77 = arith.addf %73, %76 : vector<1x128xf32>
    %cst_48 = arith.constant 0.000000e+00 : f32
    %78 = vector.broadcast %cst_48 : f32 to vector<1x128xf32>
    %79 = arith.maximumf %77, %78 : vector<1x128xf32>
    %c376 = arith.constant 376 : index
    %c0_49 = arith.constant 0 : index
    %80 = vector.load %arg1[%c376, %c0_49] : memref<512x128xf32, #tpu.memory_space<vmem>>, vector<128x20xf32>
    %cst_50 = arith.constant dense<0.000000e+00> : vector<1x20xf32>
    %81 = tpu.matmul %79, %80, %cst_50 {dimension_numbers = #tpu.dot_dimension_numbers<[1], [0], [0], [1], [0, 0, 1, 1], [], []>} : vector<1x128xf32>, vector<128x20xf32>, vector<1x20xf32> -> vector<1x20xf32>
    %c504 = arith.constant 504 : index
    %c0_51 = arith.constant 0 : index
    %82 = vector.load %arg1[%c504, %c0_51] : memref<512x128xf32, #tpu.memory_space<vmem>>, vector<1x20xf32>
    %83 = arith.addf %81, %82 : vector<1x20xf32>
    %c0_52 = arith.constant 0 : index
    %c0_53 = arith.constant 0 : index
    %84 = vector.load %arg2[%c0_52, %c0_53] : memref<1x20xf32, #tpu.memory_space<vmem>>, vector<1x20xf32>
    tpu.vector_store %arg2[%c0_52, %c0_53], %83 {strides = array<i32>} : memref<1x20xf32, #tpu.memory_space<vmem>>, vector<1x20xf32>,
    return
  }
}

</mosaic_0001>

<llo_original>
// kernel: forward.1
$region0: #{forward.1}
  #allocation0 [shape = 'u32[]', space=smem, size = 0x4, offset = 0x4, fixed_abs, tag = 'smem constant byte address 0x4 - core index']
  #allocation1 [shape = 'u32[144,128]{1,0:T(1,128)}', space=vmem, size = 0x12000, scoped, tag = 'internal scratch']
  #allocation2 [shape = 'f32[32,20]{1,0:T(8,128)}', space=vmem, size = 0x4000, scoped, tag = 'scratch operand']
  #allocation3 [shape = 'f32[8,160]{1,0:T(8,128)}', space=vmem, size = 0x2000, scoped, tag = 'scratch operand']
  %s0 = inlined_call_operand.vmem [shape: f32[32,4], index: 0, kind: input, shape index: {}]
  %s1 = inlined_call_operand.hbm [shape: f32[512,128], index: 1, kind: input, shape index: {}]
  %s2 = inlined_call_operand.vmem [shape: f32[1,20], index: 2, kind: output, shape index: {}]
  %s3 = sld [smem:[#allocation0]]
  $region22: #{forward.1} parent=0
    _
  %s5 = ssub.s32 1, %s3
  %s6 = scalar_select 0, %s5, %s3
  $region1: #{forward.1} parent=0
    #allocation4 [shape = 'u8[262144]{0}', space=vmem, size = 0x40000, scoped, tag = 'input window, operand 1, single buffered']
    #allocation5 [shape = 's32[1]{0}', space=sflag, size = 0x4, scoped, tag = 'scoped memory for forward.1']
    %7 = vsyncpa [#allocation5], 0
    // Predicated region
    $region2: #{forward.1} parent=1 // pred_check
      _
    $region3: #{forward.1} parent=1 // pred_check_branch
      %9 = sbr.rel (0) target = $region5
    $region4: #{forward.1} parent=1 // pred_region
      _
    $region5: #{forward.1} parent=1 // pred_fallthru
      _
    // Predicated region
    $region6: #{forward.1} parent=1 // pred_check
      _
    $region7: #{forward.1} parent=1 // pred_check_branch
      %11 = sbr.rel (0) target = $region9
    $region8: #{forward.1} parent=1 // pred_region
      %s13 = ssub.s32 8192, 8192
      %14 = vsyncadd [#allocation5], %s13
      %s15 = sshll.u32 [#allocation4], 4
      %s16 = int_to_ptr.vmem [resolvable:$true] %s15
      %21 = dma.hbm_to_vmem [thread:$0]  %s1, 8192, %s16, [#allocation5], 128, 128, 8
    $region9: #{forward.1} parent=1 // pred_fallthru
      _
    // Predicated region
    $region10: #{forward.1} parent=1 // pred_check
      _
    $region11: #{forward.1} parent=1 // pred_check_branch
      %23 = sbr.rel (0) target = $region13
    $region12: #{forward.1} parent=1 // pred_region
      %24 = dma.done [#allocation5], 8192
    $region13: #{forward.1} parent=1 // pred_fallthru
      _
    %v25 = vld [vmem:[#allocation4] sm:$0xff]
    %v26 = vld [vmem:[#allocation4 + $0x8] sm:$0xff]
    %v27 = vld [vmem:[#allocation4 + $0x10] sm:$0xff]
    %v28 = vld [vmem:[#allocation4 + $0x18] sm:$0xff]
    %v29 = vld [vmem:[%s0] sm:$0xff]
    %v30 = vld [vmem:[%s0 + $0x8] sm:$0xff]
    %v31 = vld [vmem:[%s0 + $0x10] sm:$0xff]
    %v32 = vld [vmem:[%s0 + $0x18] sm:$0xff]
    %vm33 = vcmask 31744
    %34 = vst.msk [vmem:[#allocation2] sm:$0xff] %vm33, %v29
    %35 = vst.msk [vmem:[#allocation2 + $0x8] sm:$0xff] %vm33, %v30
    %36 = vst.msk [vmem:[#allocation2 + $0x10] sm:$0xff] %vm33, %v31
    %37 = vst.msk [vmem:[#allocation2 + $0x18] sm:$0xff] %vm33, %v32
    %vm38 = vcmask 261120
    %v40 = vsel %vm38, %v25, 0
    %v43 = vsel %vm38, %v26, 0
    %v46 = vsel %vm38, %v27, 0
    %v49 = vsel %vm38, %v28, 0
    %51 = vmatprep.subr.mxu0 0.0
    %52 = vmatpush1.msra.mxu0 %v29
    %53 = vmatprep.subr.mxu0 0.0
    %54 = vmatpush1.msra.mxu0 %v30
    %55 = vmatprep.subr.mxu0 0.0
    %56 = vmatpush1.msra.mxu0 %v31
    %57 = vmatprep.subr.mxu0 0.0
    %58 = vmatpush1.msra.mxu0 %v32
    %59 = vmatprep.subr.mxu0 0.0
    %60 = vmatpush1.msra.mxu0 0.0
    %61 = vmatprep.subr.mxu0 0.0
    %62 = vmatpush1.msra.mxu0 0.0
    %63 = vmatprep.subr.mxu0 0.0
    %64 = vmatpush1.msra.mxu0 0.0
    %65 = vmatprep.subr.mxu0 0.0
    %66 = vmatpush1.msra.mxu0 0.0
    %67 = vmatprep.subr.mxu0 0.0
    %68 = vmatpush1.msra.mxu0 0.0
    %69 = vmatprep.subr.mxu0 0.0
    %70 = vmatpush1.msra.mxu0 0.0
    %71 = vmatprep.subr.mxu0 0.0
    %72 = vmatpush1.msra.mxu0 0.0
    %73 = vmatprep.subr.mxu0 0.0
    %74 = vmatpush1.msra.mxu0 0.0
    %75 = vmatprep.subr.mxu0 0.0
    %76 = vmatpush1.msra.mxu0 0.0
    %77 = vmatprep.subr.mxu0 0.0
    %78 = vmatpush1.msra.mxu0 0.0
    %79 = vmatprep.subr.mxu0 0.0
    %80 = vmatpush1.msra.mxu0 0.0
    %81 = vmatprep.subr.mxu0 0.0
    %82 = vmatpush1.msra.mxu0 0.0
    %83 = vmatprep.subr.mxu0 0.0
    %84 = vmatpush1.msra.mxu0 0.0
    %85 = vmatprep.subr.mxu0 0.0
    %86 = vmatpush1.msra.mxu0 0.0
    %87 = vmatprep.subr.mxu0 0.0
    %88 = vmatpush1.msra.mxu0 0.0
    %89 = vmatprep.subr.mxu0 0.0
    %90 = vmatpush1.msra.mxu0 0.0
    %91 = vmatprep.subr.mxu0 0.0
    %92 = vmatpush1.msra.mxu0 0.0
    %93 = vmatprep.subr.mxu0 0.0
    %94 = vmatpush1.msra.mxu0 0.0
    %95 = vmatprep.subr.mxu0 0.0
    %96 = vmatpush1.msra.mxu0 0.0
    %97 = vmatprep.subr.mxu0 0.0
    %98 = vmatpush1.msra.mxu0 0.0
    %99 = vmatprep.subr.mxu0 0.0
    %100 = vmatpush1.msra.mxu0 0.0
    %101 = vmatprep.subr.mxu0 0.0
    %102 = vmatpush1.msra.mxu0 0.0
    %103 = vmatprep.subr.mxu0 0.0
    %104 = vmatpush1.msra.mxu0 0.0
    %105 = vmatprep.subr.mxu0 0.0
    %106 = vmatpush1.msra.mxu0 0.0
    %107 = vmatprep.subr.mxu0 0.0
    %108 = vmatpush1.msra.mxu0 0.0
    %109 = vmatprep.subr.mxu0 0.0
    %110 = vmatpush1.msra.mxu0 0.0
    %111 = vmatprep.subr.mxu0 0.0
    %112 = vmatpush1.msra.mxu0 0.0
    %113 = vmatprep.subr.mxu0 0.0
    %114 = vmatpush1.msra.mxu0 0.0
    %115 = vmatprep.mubr.f32.mxu0 0.0
    %116 = vmatmul.mubr.f32.gmra.mrb[0].mxu0 %v40
    %v117 = vpop.f32.mrb[0].mxu0
    %v118 = vadd.f32 0.0, %v117
    %v119 = vpop.f32.mrb[0].mxu0
    %120 = vmatprep.mubr.f32.mxu0 0.0
    %121 = vmatmul.mubr.f32.gmra.mrb[0].mxu0 %v43
    %v122 = vpop.f32.mrb[0].mxu0
    %v123 = vadd.f32 0.0, %v122
    %v124 = vpop.f32.mrb[0].mxu0
    %125 = vmatprep.mubr.f32.mxu0 0.0
    %126 = vmatmul.mubr.f32.gmra.mrb[0].mxu0 %v46
    %v127 = vpop.f32.mrb[0].mxu0
    %v128 = vadd.f32 0.0, %v127
    %v129 = vpop.f32.mrb[0].mxu0
    %130 = vmatprep.mubr.f32.mxu0 0.0
    %131 = vmatmul.mubr.f32.gmra.mrb[0].mxu0 %v49
    %v132 = vpop.f32.mrb[0].mxu0
    %v133 = vadd.f32 0.0, %v132
    %v134 = vpop.f32.mrb[0].mxu0
    %135 = vdwg.mxu0
    %140 = vrot.lane.b32.xlu0 %v118, 4
    %v141 = vpop.permute.xlu0 %140
    %142 = vrot.lane.b32.xlu0 %v123, 4
    %v143 = vpop.permute.xlu0 %142
    %144 = vrot.lane.b32.xlu0 %v128, 4
    %v145 = vpop.permute.xlu0 %144
    %146 = vrot.lane.b32.xlu0 %v133, 4
    %v147 = vpop.permute.xlu0 %146
    %vm152 = vcmask 64544
    %153 = vst.msk [vmem:[#allocation2] sm:$0xff] %vm152, %v141
    %154 = vst.msk [vmem:[#allocation2 + $0x8] sm:$0xff] %vm152, %v143
    %155 = vst.msk [vmem:[#allocation2 + $0x10] sm:$0xff] %vm152, %v145
    %156 = vst.msk [vmem:[#allocation2 + $0x18] sm:$0xff] %vm152, %v147
    %157 = vmatprep.subr.mxu0 0.0
    %158 = vmatpush1.msra.mxu0 %v118
    %159 = vmatprep.subr.mxu0 0.0
    %160 = vmatpush1.msra.mxu0 %v123
    %161 = vmatprep.subr.mxu0 0.0
    %162 = vmatpush1.msra.mxu0 %v128
    %163 = vmatprep.subr.mxu0 0.0
    %164 = vmatpush1.msra.mxu0 %v133
    %165 = vmatprep.subr.mxu0 0.0
    %166 = vmatpush1.msra.mxu0 0.0
    %167 = vmatprep.subr.mxu0 0.0
    %168 = vmatpush1.msra.mxu0 0.0
    %169 = vmatprep.subr.mxu0 0.0
    %170 = vmatpush1.msra.mxu0 0.0
    %171 = vmatprep.subr.mxu0 0.0
    %172 = vmatpush1.msra.mxu0 0.0
    %173 = vmatprep.subr.mxu0 0.0
    %174 = vmatpush1.msra.mxu0 0.0
    %175 = vmatprep.subr.mxu0 0.0
    %176 = vmatpush1.msra.mxu0 0.0
    %177 = vmatprep.subr.mxu0 0.0
    %178 = vmatpush1.msra.mxu0 0.0
    %179 = vmatprep.subr.mxu0 0.0
    %180 = vmatpush1.msra.mxu0 0.0
    %181 = vmatprep.subr.mxu0 0.0
    %182 = vmatpush1.msra.mxu0 0.0
    %183 = vmatprep.subr.mxu0 0.0
    %184 = vmatpush1.msra.mxu0 0.0
    %185 = vmatprep.subr.mxu0 0.0
    %186 = vmatpush1.msra.mxu0 0.0
    %187 = vmatprep.subr.mxu0 0.0
    %188 = vmatpush1.msra.mxu0 0.0
    %189 = vmatprep.subr.mxu0 0.0
    %190 = vmatpush1.msra.mxu0 0.0
    %191 = vmatprep.subr.mxu0 0.0
    %192 = vmatpush1.msra.mxu0 0.0
    %193 = vmatprep.subr.mxu0 0.0
    %194 = vmatpush1.msra.mxu0 0.0
    %195 = vmatprep.subr.mxu0 0.0
    %196 = vmatpush1.msra.mxu0 0.0
    %197 = vmatprep.subr.mxu0 0.0
    %198 = vmatpush1.msra.mxu0 0.0
    %199 = vmatprep.subr.mxu0 0.0
    %200 = vmatpush1.msra.mxu0 0.0
    %201 = vmatprep.subr.mxu0 0.0
    %202 = vmatpush1.msra.mxu0 0.0
    %203 = vmatprep.subr.mxu0 0.0
    %204 = vmatpush1.msra.mxu0 0.0
    %205 = vmatprep.subr.mxu0 0.0
    %206 = vmatpush1.msra.mxu0 0.0
    %207 = vmatprep.subr.mxu0 0.0
    %208 = vmatpush1.msra.mxu0 0.0
    %209 = vmatprep.subr.mxu0 0.0
    %210 = vmatpush1.msra.mxu0 0.0
    %211 = vmatprep.subr.mxu0 0.0
    %212 = vmatpush1.msra.mxu0 0.0
    %213 = vmatprep.subr.mxu0 0.0
    %214 = vmatpush1.msra.mxu0 0.0
    %215 = vmatprep.subr.mxu0 0.0
    %216 = vmatpush1.msra.mxu0 0.0
    %217 = vmatprep.subr.mxu0 0.0
    %218 = vmatpush1.msra.mxu0 0.0
    %219 = vmatprep.subr.mxu0 0.0
    %220 = vmatpush1.msra.mxu0 0.0
    %221 = vmatprep.mubr.f32.mxu0 0.0
    %222 = vmatmul.mubr.f32.gmra.mrb[0].mxu0 %v40
    %v223 = vpop.f32.mrb[0].mxu0
    %v224 = vadd.f32 0.0, %v223
    %v225 = vpop.f32.mrb[0].mxu0
    %226 = vmatprep.mubr.f32.mxu0 0.0
    %227 = vmatmul.mubr.f32.gmra.mrb[0].mxu0 %v43
    %v228 = vpop.f32.mrb[0].mxu0
    %v229 = vadd.f32 0.0, %v228
    %v230 = vpop.f32.mrb[0].mxu0
    %231 = vmatprep.mubr.f32.mxu0 0.0
    %232 = vmatmul.mubr.f32.gmra.mrb[0].mxu0 %v46
    %v233 = vpop.f32.mrb[0].mxu0
    %v234 = vadd.f32 0.0, %v233
    %v235 = vpop.f32.mrb[0].mxu0
    %236 = vmatprep.mubr.f32.mxu0 0.0
    %237 = vmatmul.mubr.f32.gmra.mrb[0].mxu0 %v49
    %v238 = vpop.f32.mrb[0].mxu0
    %v239 = vadd.f32 0.0, %v238
    %v240 = vpop.f32.mrb[0].mxu0
    %241 = vdwg.mxu0
    %v242 = vmul.f32 %v224, 2.0
    %v243 = vmul.f32 %v229, 2.0
    %v244 = vmul.f32 %v234, 2.0
    %v245 = vmul.f32 %v239, 2.0
    %v246 = vsub.f32 %v242, %v29
    %v247 = vsub.f32 %v243, %v30
    %v248 = vsub.f32 %v244, %v31
    %v249 = vsub.f32 %v245, %v32
    %254 = vrot.lane.b32.xlu0 %v246, 8
    %v255 = vpop.permute.xlu0 %254
    %256 = vrot.lane.b32.xlu0 %v247, 8
    %v257 = vpop.permute.xlu0 %256
    %258 = vrot.lane.b32.xlu0 %v248, 8
    %v259 = vpop.permute.xlu0 %258
    %260 = vrot.lane.b32.xlu0 %v249, 8
    %v261 = vpop.permute.xlu0 %260
    %vm266 = vcmask 97344
    %267 = vst.msk [vmem:[#allocation2] sm:$0xff] %vm266, %v255
    %268 = vst.msk [vmem:[#allocation2 + $0x8] sm:$0xff] %vm266, %v257
    %269 = vst.msk [vmem:[#allocation2 + $0x10] sm:$0xff] %vm266, %v259
    %270 = vst.msk [vmem:[#allocation2 + $0x18] sm:$0xff] %vm266, %v261
    %271 = vmatprep.subr.mxu0 0.0
    %272 = vmatpush1.msra.mxu0 %v246
    %273 = vmatprep.subr.mxu0 0.0
    %274 = vmatpush1.msra.mxu0 %v247
    %275 = vmatprep.subr.mxu0 0.0
    %276 = vmatpush1.msra.mxu0 %v248
    %277 = vmatprep.subr.mxu0 0.0
    %278 = vmatpush1.msra.mxu0 %v249
    %279 = vmatprep.subr.mxu0 0.0
    %280 = vmatpush1.msra.mxu0 0.0
    %281 = vmatprep.subr.mxu0 0.0
    %282 = vmatpush1.msra.mxu0 0.0
    %283 = vmatprep.subr.mxu0 0.0
    %284 = vmatpush1.msra.mxu0 0.0
    %285 = vmatprep.subr.mxu0 0.0
    %286 = vmatpush1.msra.mxu0 0.0
    %287 = vmatprep.subr.mxu0 0.0
    %288 = vmatpush1.msra.mxu0 0.0
    %289 = vmatprep.subr.mxu0 0.0
    %290 = vmatpush1.msra.mxu0 0.0
    %291 = vmatprep.subr.mxu0 0.0
    %292 = vmatpush1.msra.mxu0 0.0
    %293 = vmatprep.subr.mxu0 0.0
    %294 = vmatpush1.msra.mxu0 0.0
    %295 = vmatprep.subr.mxu0 0.0
    %296 = vmatpush1.msra.mxu0 0.0
    %297 = vmatprep.subr.mxu0 0.0
    %298 = vmatpush1.msra.mxu0 0.0
    %299 = vmatprep.subr.mxu0 0.0
    %300 = vmatpush1.msra.mxu0 0.0
    %301 = vmatprep.subr.mxu0 0.0
    %302 = vmatpush1.msra.mxu0 0.0
    %303 = vmatprep.subr.mxu0 0.0
    %304 = vmatpush1.msra.mxu0 0.0
    %305 = vmatprep.subr.mxu0 0.0
    %306 = vmatpush1.msra.mxu0 0.0
    %307 = vmatprep.subr.mxu0 0.0
    %308 = vmatpush1.msra.mxu0 0.0
    %309 = vmatprep.subr.mxu0 0.0
    %310 = vmatpush1.msra.mxu0 0.0
    %311 = vmatprep.subr.mxu0 0.0
    %312 = vmatpush1.msra.mxu0 0.0
    %313 = vmatprep.subr.mxu0 0.0
    %314 = vmatpush1.msra.mxu0 0.0
    %315 = vmatprep.subr.mxu0 0.0
    %316 = vmatpush1.msra.mxu0 0.0
    %317 = vmatprep.subr.mxu0 0.0
    %318 = vmatpush1.msra.mxu0 0.0
    %319 = vmatprep.subr.mxu0 0.0
    %320 = vmatpush1.msra.mxu0 0.0
    %321 = vmatprep.subr.mxu0 0.0
    %322 = vmatpush1.msra.mxu0 0.0
    %323 = vmatprep.subr.mxu0 0.0
    %324 = vmatpush1.msra.mxu0 0.0
    %325 = vmatprep.subr.mxu0 0.0
    %326 = vmatpush1.msra.mxu0 0.0
    %327 = vmatprep.subr.mxu0 0.0
    %328 = vmatpush1.msra.mxu0 0.0
    %329 = vmatprep.subr.mxu0 0.0
    %330 = vmatpush1.msra.mxu0 0.0
    %331 = vmatprep.subr.mxu0 0.0
    %332 = vmatpush1.msra.mxu0 0.0
    %333 = vmatprep.subr.mxu0 0.0
    %334 = vmatpush1.msra.mxu0 0.0
    %335 = vmatprep.mubr.f32.mxu0 0.0
    %336 = vmatmul.mubr.f32.gmra.mrb[0].mxu0 %v40
    %v337 = vpop.f32.mrb[0].mxu0
    %v338 = vadd.f32 0.0, %v337
    %v339 = vpop.f32.mrb[0].mxu0
    %340 = vmatprep.mubr.f32.mxu0 0.0
    %341 = vmatmul.mubr.f32.gmra.mrb[0].mxu0 %v43
    %v342 = vpop.f32.mrb[0].mxu0
    %v343 = vadd.f32 0.0, %v342
    %v344 = vpop.f32.mrb[0].mxu0
    %345 = vmatprep.mubr.f32.mxu0 0.0
    %346 = vmatmul.mubr.f32.gmra.mrb[0].mxu0 %v46
    %v347 = vpop.f32.mrb[0].mxu0
    %v348 = vadd.f32 0.0, %v347
    %v349 = vpop.f32.mrb[0].mxu0
    %350 = vmatprep.mubr.f32.mxu0 0.0
    %351 = vmatmul.mubr.f32.gmra.mrb[0].mxu0 %v49
    %v352 = vpop.f32.mrb[0].mxu0
    %v353 = vadd.f32 0.0, %v352
    %v354 = vpop.f32.mrb[0].mxu0
    %355 = vdwg.mxu0
    %v356 = vmul.f32 %v338, 2.0
    %v357 = vmul.f32 %v343, 2.0
    %v358 = vmul.f32 %v348, 2.0
    %v359 = vmul.f32 %v353, 2.0
    %v360 = vsub.f32 %v356, %v118
    %v361 = vsub.f32 %v357, %v123
    %v362 = vsub.f32 %v358, %v128
    %v363 = vsub.f32 %v359, %v133
    %368 = vrot.lane.b32.xlu0 %v360, 12
    %v369 = vpop.permute.xlu0 %368
    %370 = vrot.lane.b32.xlu0 %v361, 12
    %v371 = vpop.permute.xlu0 %370
    %372 = vrot.lane.b32.xlu0 %v362, 12
    %v373 = vpop.permute.xlu0 %372
    %374 = vrot.lane.b32.xlu0 %v363, 12
    %v375 = vpop.permute.xlu0 %374
    %vm380 = vcmask 130144
    %381 = vst.msk [vmem:[#allocation2] sm:$0xff] %vm380, %v369
    %382 = vst.msk [vmem:[#allocation2 + $0x8] sm:$0xff] %vm380, %v371
    %383 = vst.msk [vmem:[#allocation2 + $0x10] sm:$0xff] %vm380, %v373
    %384 = vst.msk [vmem:[#allocation2 + $0x18] sm:$0xff] %vm380, %v375
    %385 = vmatprep.subr.mxu0 0.0
    %386 = vmatpush1.msra.mxu0 %v360
    %387 = vmatprep.subr.mxu0 0.0
    %388 = vmatpush1.msra.mxu0 %v361
    %389 = vmatprep.subr.mxu0 0.0
    %390 = vmatpush1.msra.mxu0 %v362
    %391 = vmatprep.subr.mxu0 0.0
    %392 = vmatpush1.msra.mxu0 %v363
    %393 = vmatprep.subr.mxu0 0.0
    %394 = vmatpush1.msra.mxu0 0.0
    %395 = vmatprep.subr.mxu0 0.0
    %396 = vmatpush1.msra.mxu0 0.0
    %397 = vmatprep.subr.mxu0 0.0
    %398 = vmatpush1.msra.mxu0 0.0
    %399 = vmatprep.subr.mxu0 0.0
    %400 = vmatpush1.msra.mxu0 0.0
    %401 = vmatprep.subr.mxu0 0.0
    %402 = vmatpush1.msra.mxu0 0.0
    %403 = vmatprep.subr.mxu0 0.0
    %404 = vmatpush1.msra.mxu0 0.0
    %405 = vmatprep.subr.mxu0 0.0
    %406 = vmatpush1.msra.mxu0 0.0
    %407 = vmatprep.subr.mxu0 0.0
    %408 = vmatpush1.msra.mxu0 0.0
    %409 = vmatprep.subr.mxu0 0.0
    %410 = vmatpush1.msra.mxu0 0.0
    %411 = vmatprep.subr.mxu0 0.0
    %412 = vmatpush1.msra.mxu0 0.0
    %413 = vmatprep.subr.mxu0 0.0
    %414 = vmatpush1.msra.mxu0 0.0
    %415 = vmatprep.subr.mxu0 0.0
    %416 = vmatpush1.msra.mxu0 0.0
    %417 = vmatprep.subr.mxu0 0.0
    %418 = vmatpush1.msra.mxu0 0.0
    %419 = vmatprep.subr.mxu0 0.0
    %420 = vmatpush1.msra.mxu0 0.0
    %421 = vmatprep.subr.mxu0 0.0
    %422 = vmatpush1.msra.mxu0 0.0
    %423 = vmatprep.subr.mxu0 0.0
    %424 = vmatpush1.msra.mxu0 0.0
    %425 = vmatprep.subr.mxu0 0.0
    %426 = vmatpush1.msra.mxu0 0.0
    %427 = vmatprep.subr.mxu0 0.0
    %428 = vmatpush1.msra.mxu0 0.0
    %429 = vmatprep.subr.mxu0 0.0
    %430 = vmatpush1.msra.mxu0 0.0
    %431 = vmatprep.subr.mxu0 0.0
    %432 = vmatpush1.msra.mxu0 0.0
    %433 = vmatprep.subr.mxu0 0.0
    %434 = vmatpush1.msra.mxu0 0.0
    %435 = vmatprep.subr.mxu0 0.0
    %436 = vmatpush1.msra.mxu0 0.0
    %437 = vmatprep.subr.mxu0 0.0
    %438 = vmatpush1.msra.mxu0 0.0
    %439 = vmatprep.subr.mxu0 0.0
    %440 = vmatpush1.msra.mxu0 0.0
    %441 = vmatprep.subr.mxu0 0.0
    %442 = vmatpush1.msra.mxu0 0.0
    %443 = vmatprep.subr.mxu0 0.0
    %444 = vmatpush1.msra.mxu0 0.0
    %445 = vmatprep.subr.mxu0 0.0
    %446 = vmatpush1.msra.mxu0 0.0
    %447 = vmatprep.subr.mxu0 0.0
    %448 = vmatpush1.msra.mxu0 0.0
    %449 = vmatprep.mubr.f32.mxu0 0.0
    %450 = vmatmul.mubr.f32.gmra.mrb[0].mxu0 %v40
    %v451 = vpop.f32.mrb[0].mxu0
    %v452 = vadd.f32 0.0, %v451
    %v453 = vpop.f32.mrb[0].mxu0
    %454 = vmatprep.mubr.f32.mxu0 0.0
    %455 = vmatmul.mubr.f32.gmra.mrb[0].mxu0 %v43
    %v456 = vpop.f32.mrb[0].mxu0
    %v457 = vadd.f32 0.0, %v456
    %v458 = vpop.f32.mrb[0].mxu0
    %459 = vmatprep.mubr.f32.mxu0 0.0
    %460 = vmatmul.mubr.f32.gmra.mrb[0].mxu0 %v46
    %v461 = vpop.f32.mrb[0].mxu0
    %v462 = vadd.f32 0.0, %v461
    %v463 = vpop.f32.mrb[0].mxu0
    %464 = vmatprep.mubr.f32.mxu0 0.0
    %465 = vmatmul.mubr.f32.gmra.mrb[0].mxu0 %v49
    %v466 = vpop.f32.mrb[0].mxu0
    %v467 = vadd.f32 0.0, %v466
    %v468 = vpop.f32.mrb[0].mxu0
    %469 = vdwg.mxu0
    %v470 = vmul.f32 %v452, 2.0
    %v471 = vmul.f32 %v457, 2.0
    %v472 = vmul.f32 %v462, 2.0
    %v473 = vmul.f32 %v467, 2.0
    %v474 = vsub.f32 %v470, %v246
    %v475 = vsub.f32 %v471, %v247
    %v476 = vsub.f32 %v472, %v248
    %v477 = vsub.f32 %v473, %v249
    %482 = vrot.lane.b32.xlu0 %v474, 16
    %v483 = vpop.permute.xlu0 %482
    %484 = vrot.lane.b32.xlu0 %v475, 16
    %v485 = vpop.permute.xlu0 %484
    %486 = vrot.lane.b32.xlu0 %v476, 16
    %v487 = vpop.permute.xlu0 %486
    %488 = vrot.lane.b32.xlu0 %v477, 16
    %v489 = vpop.permute.xlu0 %488
    %vm494 = vcmask 162944
    %495 = vst.msk [vmem:[#allocation2] sm:$0xff] %vm494, %v483
    %496 = vst.msk [vmem:[#allocation2 + $0x8] sm:$0xff] %vm494, %v485
    %497 = vst.msk [vmem:[#allocation2 + $0x10] sm:$0xff] %vm494, %v487
    %498 = vst.msk [vmem:[#allocation2 + $0x18] sm:$0xff] %vm494, %v489
    %v499 = vld [vmem:[#allocation2] sm:$0xff]
    %v500 = vld [vmem:[#allocation2 + $0x8] sm:$0xff]
    %v501 = vld [vmem:[#allocation2 + $0x10] sm:$0xff]
    %v502 = vld [vmem:[#allocation2 + $0x18] sm:$0xff]
    %v503 = vld [vmem:[#allocation4 + $0x28] sm:$0xff]
    %v504 = vld [vmem:[#allocation4 + $0x30] sm:$0xff]
    %v505 = vld [vmem:[#allocation4 + $0x38] sm:$0xf]
    %v506 = vld [vmem:[#allocation4 + $0x40] sm:$0x1]
    %v507 = vlaneseq
    %v508 = vshrl.u32 %v507, 7
    %v509 = vsub.s32 0, %v508
    %v510 = vrot.slane %v506, %v509
    %vm511 = vcmask 162816
    %v513 = vsel %vm511, %v499, 0
    %v516 = vsel %vm511, %v500, 0
    %v519 = vsel %vm511, %v501, 0
    %v522 = vsel %vm511, %v502, 0
    %vm524 = vcmask 1043456
    %v526 = vsel %vm524, %v505, 0
    %528 = vmatprep.subr.mxu0 0.0
    %529 = vmatpush1.msra.mxu0 %v503
    %530 = vmatprep.subr.mxu0 0.0
    %531 = vmatpush1.msra.mxu0 %v504
    %532 = vmatprep.subr.mxu0 0.0
    %533 = vmatpush1.msra.mxu0 %v526
    %534 = vmatprep.subr.mxu0 0.0
    %535 = vmatpush1.msra.mxu0 0.0
    %536 = vmatprep.subr.mxu0 0.0
    %537 = vmatpush1.msra.mxu0 0.0
    %538 = vmatprep.subr.mxu0 0.0
    %539 = vmatpush1.msra.mxu0 0.0
    %540 = vmatprep.subr.mxu0 0.0
    %541 = vmatpush1.msra.mxu0 0.0
    %542 = vmatprep.subr.mxu0 0.0
    %543 = vmatpush1.msra.mxu0 0.0
    %544 = vmatprep.subr.mxu0 0.0
    %545 = vmatpush1.msra.mxu0 0.0
    %546 = vmatprep.subr.mxu0 0.0
    %547 = vmatpush1.msra.mxu0 0.0
    %548 = vmatprep.subr.mxu0 0.0
    %549 = vmatpush1.msra.mxu0 0.0
    %550 = vmatprep.subr.mxu0 0.0
    %551 = vmatpush1.msra.mxu0 0.0
    %552 = vmatprep.subr.mxu0 0.0
    %553 = vmatpush1.msra.mxu0 0.0
    %554 = vmatprep.subr.mxu0 0.0
    %555 = vmatpush1.msra.mxu0 0.0
    %556 = vmatprep.subr.mxu0 0.0
    %557 = vmatpush1.msra.mxu0 0.0
    %558 = vmatprep.subr.mxu0 0.0
    %559 = vmatpush1.msra.mxu0 0.0
    %560 = vmatprep.subr.mxu0 0.0
    %561 = vmatpush1.msra.mxu0 0.0
    %562 = vmatprep.subr.mxu0 0.0
    %563 = vmatpush1.msra.mxu0 0.0
    %564 = vmatprep.subr.mxu0 0.0
    %565 = vmatpush1.msra.mxu0 0.0
    %566 = vmatprep.subr.mxu0 0.0
    %567 = vmatpush1.msra.mxu0 0.0
    %568 = vmatprep.subr.mxu0 0.0
    %569 = vmatpush1.msra.mxu0 0.0
    %570 = vmatprep.subr.mxu0 0.0
    %571 = vmatpush1.msra.mxu0 0.0
    %572 = vmatprep.subr.mxu0 0.0
    %573 = vmatpush1.msra.mxu0 0.0
    %574 = vmatprep.subr.mxu0 0.0
    %575 = vmatpush1.msra.mxu0 0.0
    %576 = vmatprep.subr.mxu0 0.0
    %577 = vmatpush1.msra.mxu0 0.0
    %578 = vmatprep.subr.mxu0 0.0
    %579 = vmatpush1.msra.mxu0 0.0
    %580 = vmatprep.subr.mxu0 0.0
    %581 = vmatpush1.msra.mxu0 0.0
    %582 = vmatprep.subr.mxu0 0.0
    %583 = vmatpush1.msra.mxu0 0.0
    %584 = vmatprep.subr.mxu0 0.0
    %585 = vmatpush1.msra.mxu0 0.0
    %586 = vmatprep.subr.mxu0 0.0
    %587 = vmatpush1.msra.mxu0 0.0
    %588 = vmatprep.subr.mxu0 0.0
    %589 = vmatpush1.msra.mxu0 0.0
    %590 = vmatprep.subr.mxu0 0.0
    %591 = vmatpush1.msra.mxu0 0.0
    %592 = vmatprep.mubr.f32.mxu0 0.0
    %593 = vmatmul.mubr.f32.gmra.mrb[0].mxu0 %v513
    %v594 = vpop.f32.mrb[0].mxu0
    %v595 = vadd.f32 %v510, %v594
    %v596 = vpop.f32.mrb[0].mxu0
    %597 = vmatprep.mubr.f32.mxu0 0.0
    %598 = vmatmul.mubr.f32.gmra.mrb[0].mxu0 %v516
    %v599 = vpop.f32.mrb[0].mxu0
    %v600 = vadd.f32 %v510, %v599
    %v601 = vpop.f32.mrb[0].mxu0
    %602 = vmatprep.mubr.f32.mxu0 0.0
    %603 = vmatmul.mubr.f32.gmra.mrb[0].mxu0 %v519
    %v604 = vpop.f32.mrb[0].mxu0
    %v605 = vadd.f32 %v510, %v604
    %v606 = vpop.f32.mrb[0].mxu0
    %607 = vmatprep.mubr.f32.mxu0 0.0
    %608 = vmatmul.mubr.f32.gmra.mrb[0].mxu0 %v522
    %v609 = vpop.f32.mrb[0].mxu0
    %v610 = vadd.f32 %v510, %v609
    %v611 = vpop.f32.mrb[0].mxu0
    %612 = vdwg.mxu0
    %v613 = vmax.f32 %v595, 0.0
    %v614 = vmax.f32 %v600, 0.0
    %v615 = vmax.f32 %v605, 0.0
    %v616 = vmax.f32 %v610, 0.0
    %v617 = vmax.f32 %v613, %v614
    %v618 = vmax.f32 %v615, %v616
    %v619 = vmax.f32 %v617, %v618
    %v620 = vld [vmem:[#allocation4 + $0x20] sm:$0xff]
    %621 = vst.msk [vmem:[#allocation3] sm:$0xff] %vm38, %v619
    %vm622 = vcmask 64512
    %v624 = vsel %vm622, %v620, 0
    %626 = vmatprep.subr.mxu0 0.0
    %627 = vmatpush1.msra.mxu0 %v619
    %628 = vmatprep.subr.mxu0 0.0
    %629 = vmatpush1.msra.mxu0 0.0
    %630 = vmatprep.subr.mxu0 0.0
    %631 = vmatpush1.msra.mxu0 0.0
    %632 = vmatprep.subr.mxu0 0.0
    %633 = vmatpush1.msra.mxu0 0.0
    %634 = vmatprep.subr.mxu0 0.0
    %635 = vmatpush1.msra.mxu0 0.0
    %636 = vmatprep.subr.mxu0 0.0
    %637 = vmatpush1.msra.mxu0 0.0
    %638 = vmatprep.subr.mxu0 0.0
    %639 = vmatpush1.msra.mxu0 0.0
    %640 = vmatprep.subr.mxu0 0.0
    %641 = vmatpush1.msra.mxu0 0.0
    %642 = vmatprep.subr.mxu0 0.0
    %643 = vmatpush1.msra.mxu0 0.0
    %644 = vmatprep.subr.mxu0 0.0
    %645 = vmatpush1.msra.mxu0 0.0
    %646 = vmatprep.subr.mxu0 0.0
    %647 = vmatpush1.msra.mxu0 0.0
    %648 = vmatprep.subr.mxu0 0.0
    %649 = vmatpush1.msra.mxu0 0.0
    %650 = vmatprep.subr.mxu0 0.0
    %651 = vmatpush1.msra.mxu0 0.0
    %652 = vmatprep.subr.mxu0 0.0
    %653 = vmatpush1.msra.mxu0 0.0
    %654 = vmatprep.subr.mxu0 0.0
    %655 = vmatpush1.msra.mxu0 0.0
    %656 = vmatprep.subr.mxu0 0.0
    %657 = vmatpush1.msra.mxu0 0.0
    %658 = vmatprep.subr.mxu0 0.0
    %659 = vmatpush1.msra.mxu0 0.0
    %660 = vmatprep.subr.mxu0 0.0
    %661 = vmatpush1.msra.mxu0 0.0
    %662 = vmatprep.subr.mxu0 0.0
    %663 = vmatpush1.msra.mxu0 0.0
    %664 = vmatprep.subr.mxu0 0.0
    %665 = vmatpush1.msra.mxu0 0.0
    %666 = vmatprep.subr.mxu0 0.0
    %667 = vmatpush1.msra.mxu0 0.0
    %668 = vmatprep.subr.mxu0 0.0
    %669 = vmatpush1.msra.mxu0 0.0
    %670 = vmatprep.subr.mxu0 0.0
    %671 = vmatpush1.msra.mxu0 0.0
    %672 = vmatprep.subr.mxu0 0.0
    %673 = vmatpush1.msra.mxu0 0.0
    %674 = vmatprep.subr.mxu0 0.0
    %675 = vmatpush1.msra.mxu0 0.0
    %676 = vmatprep.subr.mxu0 0.0
    %677 = vmatpush1.msra.mxu0 0.0
    %678 = vmatprep.subr.mxu0 0.0
    %679 = vmatpush1.msra.mxu0 0.0
    %680 = vmatprep.subr.mxu0 0.0
    %681 = vmatpush1.msra.mxu0 0.0
    %682 = vmatprep.subr.mxu0 0.0
    %683 = vmatpush1.msra.mxu0 0.0
    %684 = vmatprep.subr.mxu0 0.0
    %685 = vmatpush1.msra.mxu0 0.0
    %686 = vmatprep.subr.mxu0 0.0
    %687 = vmatpush1.msra.mxu0 0.0
    %688 = vmatprep.subr.mxu0 0.0
    %689 = vmatpush1.msra.mxu0 0.0
    %690 = vmatprep.mubr.f32.mxu0 0.0
    %691 = vmatmul.mubr.f32.gmra.mrb[0].mxu0 %v624
    %v692 = vpop.f32.mrb[0].mxu0
    %v693 = vadd.f32 0.0, %v692
    %v694 = vpop.f32.mrb[0].mxu0
    %695 = vdwg.mxu0
    %697 = vrot.lane.b32.xlu0 %v693, 32
    %v698 = vpop.permute.xlu0 %697
    %vm700 = vcmask 523520
    %701 = vst.msk [vmem:[#allocation3] sm:$0xff] %vm700, %v698
    %702 = vmatprep.subr.mxu0 0.0
    %703 = vmatpush1.msra.mxu0 %v693
    %704 = vmatprep.subr.mxu0 0.0
    %705 = vmatpush1.msra.mxu0 0.0
    %706 = vmatprep.subr.mxu0 0.0
    %707 = vmatpush1.msra.mxu0 0.0
    %708 = vmatprep.subr.mxu0 0.0
    %709 = vmatpush1.msra.mxu0 0.0
    %710 = vmatprep.subr.mxu0 0.0
    %711 = vmatpush1.msra.mxu0 0.0
    %712 = vmatprep.subr.mxu0 0.0
    %713 = vmatpush1.msra.mxu0 0.0
    %714 = vmatprep.subr.mxu0 0.0
    %715 = vmatpush1.msra.mxu0 0.0
    %716 = vmatprep.subr.mxu0 0.0
    %717 = vmatpush1.msra.mxu0 0.0
    %718 = vmatprep.subr.mxu0 0.0
    %719 = vmatpush1.msra.mxu0 0.0
    %720 = vmatprep.subr.mxu0 0.0
    %721 = vmatpush1.msra.mxu0 0.0
    %722 = vmatprep.subr.mxu0 0.0
    %723 = vmatpush1.msra.mxu0 0.0
    %724 = vmatprep.subr.mxu0 0.0
    %725 = vmatpush1.msra.mxu0 0.0
    %726 = vmatprep.subr.mxu0 0.0
    %727 = vmatpush1.msra.mxu0 0.0
    %728 = vmatprep.subr.mxu0 0.0
    %729 = vmatpush1.msra.mxu0 0.0
    %730 = vmatprep.subr.mxu0 0.0
    %731 = vmatpush1.msra.mxu0 0.0
    %732 = vmatprep.subr.mxu0 0.0
    %733 = vmatpush1.msra.mxu0 0.0
    %734 = vmatprep.subr.mxu0 0.0
    %735 = vmatpush1.msra.mxu0 0.0
    %736 = vmatprep.subr.mxu0 0.0
    %737 = vmatpush1.msra.mxu0 0.0
    %738 = vmatprep.subr.mxu0 0.0
    %739 = vmatpush1.msra.mxu0 0.0
    %740 = vmatprep.subr.mxu0 0.0
    %741 = vmatpush1.msra.mxu0 0.0
    %742 = vmatprep.subr.mxu0 0.0
    %743 = vmatpush1.msra.mxu0 0.0
    %744 = vmatprep.subr.mxu0 0.0
    %745 = vmatpush1.msra.mxu0 0.0
    %746 = vmatprep.subr.mxu0 0.0
    %747 = vmatpush1.msra.mxu0 0.0
    %748 = vmatprep.subr.mxu0 0.0
    %749 = vmatpush1.msra.mxu0 0.0
    %750 = vmatprep.subr.mxu0 0.0
    %751 = vmatpush1.msra.mxu0 0.0
    %752 = vmatprep.subr.mxu0 0.0
    %753 = vmatpush1.msra.mxu0 0.0
    %754 = vmatprep.subr.mxu0 0.0
    %755 = vmatpush1.msra.mxu0 0.0
    %756 = vmatprep.subr.mxu0 0.0
    %757 = vmatpush1.msra.mxu0 0.0
    %758 = vmatprep.subr.mxu0 0.0
    %759 = vmatpush1.msra.mxu0 0.0
    %760 = vmatprep.subr.mxu0 0.0
    %761 = vmatpush1.msra.mxu0 0.0
    %762 = vmatprep.subr.mxu0 0.0
    %763 = vmatpush1.msra.mxu0 0.0
    %764 = vmatprep.subr.mxu0 0.0
    %765 = vmatpush1.msra.mxu0 0.0
    %766 = vmatprep.mubr.f32.mxu0 0.0
    %767 = vmatmul.mubr.f32.gmra.mrb[0].mxu0 %v624
    %v768 = vpop.f32.mrb[0].mxu0
    %v769 = vadd.f32 0.0, %v768
    %v770 = vpop.f32.mrb[0].mxu0
    %771 = vdwg.mxu0
    %v772 = vmul.f32 %v769, 2.0
    %v773 = vsub.f32 %v772, %v619
    %775 = vrot.lane.b32.xlu0 %v773, 64
    %v776 = vpop.permute.xlu0 %775
    %vm778 = vcmask 785920
    %779 = vst.msk [vmem:[#allocation3] sm:$0xff] %vm778, %v776
    %780 = vmatprep.subr.mxu0 0.0
    %781 = vmatpush1.msra.mxu0 %v773
    %782 = vmatprep.subr.mxu0 0.0
    %783 = vmatpush1.msra.mxu0 0.0
    %784 = vmatprep.subr.mxu0 0.0
    %785 = vmatpush1.msra.mxu0 0.0
    %786 = vmatprep.subr.mxu0 0.0
    %787 = vmatpush1.msra.mxu0 0.0
    %788 = vmatprep.subr.mxu0 0.0
    %789 = vmatpush1.msra.mxu0 0.0
    %790 = vmatprep.subr.mxu0 0.0
    %791 = vmatpush1.msra.mxu0 0.0
    %792 = vmatprep.subr.mxu0 0.0
    %793 = vmatpush1.msra.mxu0 0.0
    %794 = vmatprep.subr.mxu0 0.0
    %795 = vmatpush1.msra.mxu0 0.0
    %796 = vmatprep.subr.mxu0 0.0
    %797 = vmatpush1.msra.mxu0 0.0
    %798 = vmatprep.subr.mxu0 0.0
    %799 = vmatpush1.msra.mxu0 0.0
    %800 = vmatprep.subr.mxu0 0.0
    %801 = vmatpush1.msra.mxu0 0.0
    %802 = vmatprep.subr.mxu0 0.0
    %803 = vmatpush1.msra.mxu0 0.0
    %804 = vmatprep.subr.mxu0 0.0
    %805 = vmatpush1.msra.mxu0 0.0
    %806 = vmatprep.subr.mxu0 0.0
    %807 = vmatpush1.msra.mxu0 0.0
    %808 = vmatprep.subr.mxu0 0.0
    %809 = vmatpush1.msra.mxu0 0.0
    %810 = vmatprep.subr.mxu0 0.0
    %811 = vmatpush1.msra.mxu0 0.0
    %812 = vmatprep.subr.mxu0 0.0
    %813 = vmatpush1.msra.mxu0 0.0
    %814 = vmatprep.subr.mxu0 0.0
    %815 = vmatpush1.msra.mxu0 0.0
    %816 = vmatprep.subr.mxu0 0.0
    %817 = vmatpush1.msra.mxu0 0.0
    %818 = vmatprep.subr.mxu0 0.0
    %819 = vmatpush1.msra.mxu0 0.0
    %820 = vmatprep.subr.mxu0 0.0
    %821 = vmatpush1.msra.mxu0 0.0
    %822 = vmatprep.subr.mxu0 0.0
    %823 = vmatpush1.msra.mxu0 0.0
    %824 = vmatprep.subr.mxu0 0.0
    %825 = vmatpush1.msra.mxu0 0.0
    %826 = vmatprep.subr.mxu0 0.0
    %827 = vmatpush1.msra.mxu0 0.0
    %828 = vmatprep.subr.mxu0 0.0
    %829 = vmatpush1.msra.mxu0 0.0
    %830 = vmatprep.subr.mxu0 0.0
    %831 = vmatpush1.msra.mxu0 0.0
    %832 = vmatprep.subr.mxu0 0.0
    %833 = vmatpush1.msra.mxu0 0.0
    %834 = vmatprep.subr.mxu0 0.0
    %835 = vmatpush1.msra.mxu0 0.0
    %836 = vmatprep.subr.mxu0 0.0
    %837 = vmatpush1.msra.mxu0 0.0
    %838 = vmatprep.subr.mxu0 0.0
    %839 = vmatpush1.msra.mxu0 0.0
    %840 = vmatprep.subr.mxu0 0.0
    %841 = vmatpush1.msra.mxu0 0.0
    %842 = vmatprep.subr.mxu0 0.0
    %843 = vmatpush1.msra.mxu0 0.0
    %844 = vmatprep.mubr.f32.mxu0 0.0
    %845 = vmatmul.mubr.f32.gmra.mrb[0].mxu0 %v624
    %v846 = vpop.f32.mrb[0].mxu0
    %v847 = vadd.f32 0.0, %v846
    %v848 = vpop.f32.mrb[0].mxu0
    %849 = vdwg.mxu0
    %v850 = vmul.f32 %v847, 2.0
    %v851 = vsub.f32 %v850, %v693
    %853 = vrot.lane.b32.xlu0 %v851, 96
    %v854 = vpop.permute.xlu0 %853
    %vm856 = vcmask 1048320
    %857 = vst.msk [vmem:[#allocation3] sm:$0xff] %vm856, %v854
    %858 = vmatprep.subr.mxu0 0.0
    %859 = vmatpush1.msra.mxu0 %v851
    %860 = vmatprep.subr.mxu0 0.0
    %861 = vmatpush1.msra.mxu0 0.0
    %862 = vmatprep.subr.mxu0 0.0
    %863 = vmatpush1.msra.mxu0 0.0
    %864 = vmatprep.subr.mxu0 0.0
    %865 = vmatpush1.msra.mxu0 0.0
    %866 = vmatprep.subr.mxu0 0.0
    %867 = vmatpush1.msra.mxu0 0.0
    %868 = vmatprep.subr.mxu0 0.0
    %869 = vmatpush1.msra.mxu0 0.0
    %870 = vmatprep.subr.mxu0 0.0
    %871 = vmatpush1.msra.mxu0 0.0
    %872 = vmatprep.subr.mxu0 0.0
    %873 = vmatpush1.msra.mxu0 0.0
    %874 = vmatprep.subr.mxu0 0.0
    %875 = vmatpush1.msra.mxu0 0.0
    %876 = vmatprep.subr.mxu0 0.0
    %877 = vmatpush1.msra.mxu0 0.0
    %878 = vmatprep.subr.mxu0 0.0
    %879 = vmatpush1.msra.mxu0 0.0
    %880 = vmatprep.subr.mxu0 0.0
    %881 = vmatpush1.msra.mxu0 0.0
    %882 = vmatprep.subr.mxu0 0.0
    %883 = vmatpush1.msra.mxu0 0.0
    %884 = vmatprep.subr.mxu0 0.0
    %885 = vmatpush1.msra.mxu0 0.0
    %886 = vmatprep.subr.mxu0 0.0
    %887 = vmatpush1.msra.mxu0 0.0
    %888 = vmatprep.subr.mxu0 0.0
    %889 = vmatpush1.msra.mxu0 0.0
    %890 = vmatprep.subr.mxu0 0.0
    %891 = vmatpush1.msra.mxu0 0.0
    %892 = vmatprep.subr.mxu0 0.0
    %893 = vmatpush1.msra.mxu0 0.0
    %894 = vmatprep.subr.mxu0 0.0
    %895 = vmatpush1.msra.mxu0 0.0
    %896 = vmatprep.subr.mxu0 0.0
    %897 = vmatpush1.msra.mxu0 0.0
    %898 = vmatprep.subr.mxu0 0.0
    %899 = vmatpush1.msra.mxu0 0.0
    %900 = vmatprep.subr.mxu0 0.0
    %901 = vmatpush1.msra.mxu0 0.0
    %902 = vmatprep.subr.mxu0 0.0
    %903 = vmatpush1.msra.mxu0 0.0
    %904 = vmatprep.subr.mxu0 0.0
    %905 = vmatpush1.msra.mxu0 0.0
    %906 = vmatprep.subr.mxu0 0.0
    %907 = vmatpush1.msra.mxu0 0.0
    %908 = vmatprep.subr.mxu0 0.0
    %909 = vmatpush1.msra.mxu0 0.0
    %910 = vmatprep.subr.mxu0 0.0
    %911 = vmatpush1.msra.mxu0 0.0
    %912 = vmatprep.subr.mxu0 0.0
    %913 = vmatpush1.msra.mxu0 0.0
    %914 = vmatprep.subr.mxu0 0.0
    %915 = vmatpush1.msra.mxu0 0.0
    %916 = vmatprep.subr.mxu0 0.0
    %917 = vmatpush1.msra.mxu0 0.0
    %918 = vmatprep.subr.mxu0 0.0
    %919 = vmatpush1.msra.mxu0 0.0
    %920 = vmatprep.subr.mxu0 0.0
    %921 = vmatpush1.msra.mxu0 0.0
    %922 = vmatprep.mubr.f32.mxu0 0.0
    %923 = vmatmul.mubr.f32.gmra.mrb[0].mxu0 %v624
    %v924 = vpop.f32.mrb[0].mxu0
    %v925 = vadd.f32 0.0, %v924
    %v926 = vpop.f32.mrb[0].mxu0
    %927 = vdwg.mxu0
    %v928 = vmul.f32 %v925, 2.0
    %v929 = vsub.f32 %v928, %v773
    %930 = vst.msk [vmem:[#allocation3 + $0x8] sm:$0xff] %vm38, %v929
    %v931 = vld [vmem:[#allocation3] sm:$0xff]
    %v932 = vld [vmem:[#allocation3 + $0x8] sm:$0xff]
    %v933 = vld [vmem:[#allocation4 + $0x48] sm:$0xff]
    %v934 = vld [vmem:[#allocation4 + $0x50] sm:$0xff]
    %v935 = vld [vmem:[#allocation4 + $0x58] sm:$0xff]
    %v936 = vld [vmem:[#allocation4 + $0x60] sm:$0xff]
    %v937 = vld [vmem:[#allocation4 + $0x68] sm:$0xff]
    %v938 = vld [vmem:[#allocation4 + $0x70] sm:$0xff]
    %v939 = vld [vmem:[#allocation4 + $0x78] sm:$0xff]
    %v940 = vld [vmem:[#allocation4 + $0x80] sm:$0xff]
    %v941 = vld [vmem:[#allocation4 + $0x88] sm:$0xff]
    %v942 = vld [vmem:[#allocation4 + $0x90] sm:$0xff]
    %v943 = vld [vmem:[#allocation4 + $0x98] sm:$0xff]
    %v944 = vld [vmem:[#allocation4 + $0xa0] sm:$0xff]
    %v945 = vld [vmem:[#allocation4 + $0xa8] sm:$0xff]
    %v946 = vld [vmem:[#allocation4 + $0xb0] sm:$0xff]
    %v947 = vld [vmem:[#allocation4 + $0xb8] sm:$0xff]
    %v948 = vld [vmem:[#allocation4 + $0xc0] sm:$0xff]
    %v949 = vld [vmem:[#allocation4 + $0xc8] sm:$0xff]
    %v950 = vld [vmem:[#allocation4 + $0xd0] sm:$0xff]
    %v951 = vld [vmem:[#allocation4 + $0xd8] sm:$0xff]
    %v952 = vld [vmem:[#allocation4 + $0xe0] sm:$0xff]
    %v953 = vld [vmem:[#allocation4 + $0xe8] sm:$0x1]
    %v954 = vlaneseq
    %v955 = vshrl.u32 %v954, 7
    %v956 = vsub.s32 0, %v955
    %v957 = vrot.slane %v953, %v956
    %v959 = vsel %vm38, %v932, 0
    %961 = vmatprep.subr.mxu0 0.0
    %962 = vmatpush1.msra.mxu0 %v933
    %963 = vmatprep.subr.mxu0 0.0
    %964 = vmatpush1.msra.mxu0 %v934
    %965 = vmatprep.subr.mxu0 0.0
    %966 = vmatpush1.msra.mxu0 %v935
    %967 = vmatprep.subr.mxu0 0.0
    %968 = vmatpush1.msra.mxu0 %v936
    %969 = vmatprep.subr.mxu0 0.0
    %970 = vmatpush1.msra.mxu0 %v937
    %971 = vmatprep.subr.mxu0 0.0
    %972 = vmatpush1.msra.mxu0 %v938
    %973 = vmatprep.subr.mxu0 0.0
    %974 = vmatpush1.msra.mxu0 %v939
    %975 = vmatprep.subr.mxu0 0.0
    %976 = vmatpush1.msra.mxu0 %v940
    %977 = vmatprep.subr.mxu0 0.0
    %978 = vmatpush1.msra.mxu0 %v941
    %979 = vmatprep.subr.mxu0 0.0
    %980 = vmatpush1.msra.mxu0 %v942
    %981 = vmatprep.subr.mxu0 0.0
    %982 = vmatpush1.msra.mxu0 %v943
    %983 = vmatprep.subr.mxu0 0.0
    %984 = vmatpush1.msra.mxu0 %v944
    %985 = vmatprep.subr.mxu0 0.0
    %986 = vmatpush1.msra.mxu0 %v945
    %987 = vmatprep.subr.mxu0 0.0
    %988 = vmatpush1.msra.mxu0 %v946
    %989 = vmatprep.subr.mxu0 0.0
    %990 = vmatpush1.msra.mxu0 %v947
    %991 = vmatprep.subr.mxu0 0.0
    %992 = vmatpush1.msra.mxu0 %v948
    %993 = vmatprep.subr.mxu0 0.0
    %994 = vmatpush1.msra.mxu0 %v949
    %995 = vmatprep.subr.mxu0 0.0
    %996 = vmatpush1.msra.mxu0 %v950
    %997 = vmatprep.subr.mxu0 0.0
    %998 = vmatpush1.msra.mxu0 %v951
    %999 = vmatprep.subr.mxu0 0.0
    %1000 = vmatpush1.msra.mxu0 %v952
    %1001 = vmatprep.subr.mxu0 0.0
    %1002 = vmatpush1.msra.mxu0 0.0
    %1003 = vmatprep.subr.mxu0 0.0
    %1004 = vmatpush1.msra.mxu0 0.0
    %1005 = vmatprep.subr.mxu0 0.0
    %1006 = vmatpush1.msra.mxu0 0.0
    %1007 = vmatprep.subr.mxu0 0.0
    %1008 = vmatpush1.msra.mxu0 0.0
    %1009 = vmatprep.subr.mxu0 0.0
    %1010 = vmatpush1.msra.mxu0 0.0
    %1011 = vmatprep.subr.mxu0 0.0
    %1012 = vmatpush1.msra.mxu0 0.0
    %1013 = vmatprep.subr.mxu0 0.0
    %1014 = vmatpush1.msra.mxu0 0.0
    %1015 = vmatprep.subr.mxu0 0.0
    %1016 = vmatpush1.msra.mxu0 0.0
    %1017 = vmatprep.subr.mxu0 0.0
    %1018 = vmatpush1.msra.mxu0 0.0
    %1019 = vmatprep.subr.mxu0 0.0
    %1020 = vmatpush1.msra.mxu0 0.0
    %1021 = vmatprep.subr.mxu0 0.0
    %1022 = vmatpush1.msra.mxu0 0.0
    %1023 = vmatprep.subr.mxu0 0.0
    %1024 = vmatpush1.msra.mxu0 0.0
    %1025 = vmatprep.mubr.f32.mxu0 %v959
    %1026 = vmatmul.mubr.f32.gmra.mrb[0].mxu0 %v931
    %v1027 = vpop.f32.mrb[0].mxu0
    %v1028 = vadd.f32 %v957, %v1027
    %v1029 = vpop.f32.mrb[0].mxu0
    %1030 = vdwg.mxu0
    %v1031 = vmax.f32 %v1028, 0.0
    %v1033 = vrot.slane %v1031, 2
    %v1035 = vmax.f32 %v1031, %v1033
    %v1037 = vrot.slane %v1035, 4
    %v1039 = vmax.f32 %v1035, %v1037
    %v1040 = vld [vmem:[#allocation4 + $0x170] sm:$0x1]
    %v1041 = vld [vmem:[#allocation4 + $0xf0] sm:$0xff]
    %v1042 = vld [vmem:[#allocation4 + $0xf8] sm:$0xff]
    %v1043 = vld [vmem:[#allocation4 + $0x100] sm:$0xff]
    %v1044 = vld [vmem:[#allocation4 + $0x108] sm:$0xff]
    %v1045 = vld [vmem:[#allocation4 + $0x110] sm:$0xff]
    %v1046 = vld [vmem:[#allocation4 + $0x118] sm:$0xff]
    %v1047 = vld [vmem:[#allocation4 + $0x120] sm:$0xff]
    %v1048 = vld [vmem:[#allocation4 + $0x128] sm:$0xff]
    %vm1049 = vcmask 523264
    %v1051 = vsel %vm1049, %v1039, 0
    %1053 = vmatprep.subr.mxu0 0.0
    %1054 = vmatpush1.msra.mxu0 %v1041
    %1055 = vmatprep.subr.mxu0 0.0
    %1056 = vmatpush1.msra.mxu0 %v1042
    %1057 = vmatprep.subr.mxu0 0.0
    %1058 = vmatpush1.msra.mxu0 %v1043
    %1059 = vmatprep.subr.mxu0 0.0
    %1060 = vmatpush1.msra.mxu0 %v1044
    %1061 = vmatprep.subr.mxu0 0.0
    %1062 = vmatpush1.msra.mxu0 %v1045
    %1063 = vmatprep.subr.mxu0 0.0
    %1064 = vmatpush1.msra.mxu0 %v1046
    %1065 = vmatprep.subr.mxu0 0.0
    %1066 = vmatpush1.msra.mxu0 %v1047
    %1067 = vmatprep.subr.mxu0 0.0
    %1068 = vmatpush1.msra.mxu0 %v1048
    %1069 = vmatprep.subr.mxu0 0.0
    %1070 = vmatpush1.msra.mxu0 0.0
    %1071 = vmatprep.subr.mxu0 0.0
    %1072 = vmatpush1.msra.mxu0 0.0
    %1073 = vmatprep.subr.mxu0 0.0
    %1074 = vmatpush1.msra.mxu0 0.0
    %1075 = vmatprep.subr.mxu0 0.0
    %1076 = vmatpush1.msra.mxu0 0.0
    %1077 = vmatprep.subr.mxu0 0.0
    %1078 = vmatpush1.msra.mxu0 0.0
    %1079 = vmatprep.subr.mxu0 0.0
    %1080 = vmatpush1.msra.mxu0 0.0
    %1081 = vmatprep.subr.mxu0 0.0
    %1082 = vmatpush1.msra.mxu0 0.0
    %1083 = vmatprep.subr.mxu0 0.0
    %1084 = vmatpush1.msra.mxu0 0.0
    %1085 = vmatprep.subr.mxu0 0.0
    %1086 = vmatpush1.msra.mxu0 0.0
    %1087 = vmatprep.subr.mxu0 0.0
    %1088 = vmatpush1.msra.mxu0 0.0
    %1089 = vmatprep.subr.mxu0 0.0
    %1090 = vmatpush1.msra.mxu0 0.0
    %1091 = vmatprep.subr.mxu0 0.0
    %1092 = vmatpush1.msra.mxu0 0.0
    %1093 = vmatprep.subr.mxu0 0.0
    %1094 = vmatpush1.msra.mxu0 0.0
    %1095 = vmatprep.subr.mxu0 0.0
    %1096 = vmatpush1.msra.mxu0 0.0
    %1097 = vmatprep.subr.mxu0 0.0
    %1098 = vmatpush1.msra.mxu0 0.0
    %1099 = vmatprep.subr.mxu0 0.0
    %1100 = vmatpush1.msra.mxu0 0.0
    %1101 = vmatprep.subr.mxu0 0.0
    %1102 = vmatpush1.msra.mxu0 0.0
    %1103 = vmatprep.subr.mxu0 0.0
    %1104 = vmatpush1.msra.mxu0 0.0
    %1105 = vmatprep.subr.mxu0 0.0
    %1106 = vmatpush1.msra.mxu0 0.0
    %1107 = vmatprep.subr.mxu0 0.0
    %1108 = vmatpush1.msra.mxu0 0.0
    %1109 = vmatprep.subr.mxu0 0.0
    %1110 = vmatpush1.msra.mxu0 0.0
    %1111 = vmatprep.subr.mxu0 0.0
    %1112 = vmatpush1.msra.mxu0 0.0
    %1113 = vmatprep.subr.mxu0 0.0
    %1114 = vmatpush1.msra.mxu0 0.0
    %1115 = vmatprep.subr.mxu0 0.0
    %1116 = vmatpush1.msra.mxu0 0.0
    %1117 = vmatprep.mubr.f32.mxu0 0.0
    %1118 = vmatmul.mubr.f32.gmra.mrb[0].mxu0 %v1051
    %v1119 = vpop.f32.mrb[0].mxu0
    %v1120 = vadd.f32 0.0, %v1119
    %v1121 = vpop.f32.mrb[0].mxu0
    %1122 = vdwg.mxu0
    %v1123 = vadd.f32 %v1040, %v1120
    %v1124 = vld [vmem:[#allocation4 + $0x130] sm:$0xff]
    %v1125 = vld [vmem:[#allocation4 + $0x138] sm:$0xff]
    %v1126 = vld [vmem:[#allocation4 + $0x140] sm:$0xff]
    %v1127 = vld [vmem:[#allocation4 + $0x148] sm:$0xff]
    %v1128 = vld [vmem:[#allocation4 + $0x150] sm:$0xff]
    %v1129 = vld [vmem:[#allocation4 + $0x158] sm:$0xff]
    %v1130 = vld [vmem:[#allocation4 + $0x160] sm:$0xff]
    %v1131 = vld [vmem:[#allocation4 + $0x168] sm:$0xff]
    %v1132 = vrot.slane %v1039, 1
    %v1133 = vsel %vm1049, %v1132, 0
    %1135 = vmatprep.subr.mxu0 0.0
    %1136 = vmatpush1.msra.mxu0 %v1124
    %1137 = vmatprep.subr.mxu0 0.0
    %1138 = vmatpush1.msra.mxu0 %v1125
    %1139 = vmatprep.subr.mxu0 0.0
    %1140 = vmatpush1.msra.mxu0 %v1126
    %1141 = vmatprep.subr.mxu0 0.0
    %1142 = vmatpush1.msra.mxu0 %v1127
    %1143 = vmatprep.subr.mxu0 0.0
    %1144 = vmatpush1.msra.mxu0 %v1128
    %1145 = vmatprep.subr.mxu0 0.0
    %1146 = vmatpush1.msra.mxu0 %v1129
    %1147 = vmatprep.subr.mxu0 0.0
    %1148 = vmatpush1.msra.mxu0 %v1130
    %1149 = vmatprep.subr.mxu0 0.0
    %1150 = vmatpush1.msra.mxu0 %v1131
    %1151 = vmatprep.subr.mxu0 0.0
    %1152 = vmatpush1.msra.mxu0 0.0
    %1153 = vmatprep.subr.mxu0 0.0
    %1154 = vmatpush1.msra.mxu0 0.0
    %1155 = vmatprep.subr.mxu0 0.0
    %1156 = vmatpush1.msra.mxu0 0.0
    %1157 = vmatprep.subr.mxu0 0.0
    %1158 = vmatpush1.msra.mxu0 0.0
    %1159 = vmatprep.subr.mxu0 0.0
    %1160 = vmatpush1.msra.mxu0 0.0
    %1161 = vmatprep.subr.mxu0 0.0
    %1162 = vmatpush1.msra.mxu0 0.0
    %1163 = vmatprep.subr.mxu0 0.0
    %1164 = vmatpush1.msra.mxu0 0.0
    %1165 = vmatprep.subr.mxu0 0.0
    %1166 = vmatpush1.msra.mxu0 0.0
    %1167 = vmatprep.subr.mxu0 0.0
    %1168 = vmatpush1.msra.mxu0 0.0
    %1169 = vmatprep.subr.mxu0 0.0
    %1170 = vmatpush1.msra.mxu0 0.0
    %1171 = vmatprep.subr.mxu0 0.0
    %1172 = vmatpush1.msra.mxu0 0.0
    %1173 = vmatprep.subr.mxu0 0.0
    %1174 = vmatpush1.msra.mxu0 0.0
    %1175 = vmatprep.subr.mxu0 0.0
    %1176 = vmatpush1.msra.mxu0 0.0
    %1177 = vmatprep.subr.mxu0 0.0
    %1178 = vmatpush1.msra.mxu0 0.0
    %1179 = vmatprep.subr.mxu0 0.0
    %1180 = vmatpush1.msra.mxu0 0.0
    %1181 = vmatprep.subr.mxu0 0.0
    %1182 = vmatpush1.msra.mxu0 0.0
    %1183 = vmatprep.subr.mxu0 0.0
    %1184 = vmatpush1.msra.mxu0 0.0
    %1185 = vmatprep.subr.mxu0 0.0
    %1186 = vmatpush1.msra.mxu0 0.0
    %1187 = vmatprep.subr.mxu0 0.0
    %1188 = vmatpush1.msra.mxu0 0.0
    %1189 = vmatprep.subr.mxu0 0.0
    %1190 = vmatpush1.msra.mxu0 0.0
    %1191 = vmatprep.subr.mxu0 0.0
    %1192 = vmatpush1.msra.mxu0 0.0
    %1193 = vmatprep.subr.mxu0 0.0
    %1194 = vmatpush1.msra.mxu0 0.0
    %1195 = vmatprep.subr.mxu0 0.0
    %1196 = vmatpush1.msra.mxu0 0.0
    %1197 = vmatprep.subr.mxu0 0.0
    %1198 = vmatpush1.msra.mxu0 0.0
    %1199 = vmatprep.mubr.f32.mxu0 0.0
    %1200 = vmatmul.mubr.f32.gmra.mrb[0].mxu0 %v1133
    %v1201 = vpop.f32.mrb[0].mxu0
    %v1202 = vadd.f32 0.0, %v1201
    %v1203 = vpop.f32.mrb[0].mxu0
    %1204 = vdwg.mxu0
    %v1205 = vadd.f32 %v1123, %v1202
    %v1206 = vmax.f32 %v1205, 0.0
    %v1207 = vld [vmem:[#allocation4 + $0x178] sm:$0xff]
    %v1208 = vld [vmem:[#allocation4 + $0x180] sm:$0xff]
    %v1209 = vld [vmem:[#allocation4 + $0x188] sm:$0xff]
    %v1210 = vld [vmem:[#allocation4 + $0x190] sm:$0xff]
    %v1211 = vld [vmem:[#allocation4 + $0x198] sm:$0xff]
    %v1212 = vld [vmem:[#allocation4 + $0x1a0] sm:$0xff]
    %v1213 = vld [vmem:[#allocation4 + $0x1a8] sm:$0xff]
    %v1214 = vld [vmem:[#allocation4 + $0x1b0] sm:$0xff]
    %v1215 = vld [vmem:[#allocation4 + $0x1b8] sm:$0xff]
    %v1216 = vld [vmem:[#allocation4 + $0x1c0] sm:$0xff]
    %v1217 = vld [vmem:[#allocation4 + $0x1c8] sm:$0xff]
    %v1218 = vld [vmem:[#allocation4 + $0x1d0] sm:$0xff]
    %v1219 = vld [vmem:[#allocation4 + $0x1d8] sm:$0xff]
    %v1220 = vld [vmem:[#allocation4 + $0x1e0] sm:$0xff]
    %v1221 = vld [vmem:[#allocation4 + $0x1e8] sm:$0xff]
    %v1222 = vld [vmem:[#allocation4 + $0x1f0] sm:$0xff]
    %v1223 = vld [vmem:[#allocation4 + $0x1f8] sm:$0x1]
    %1224 = vmatprep.subr.mxu0 0.0
    %1225 = vmatpush1.msra.mxu0 %v1207
    %1226 = vmatprep.subr.mxu0 0.0
    %1227 = vmatpush1.msra.mxu0 %v1208
    %1228 = vmatprep.subr.mxu0 0.0
    %1229 = vmatpush1.msra.mxu0 %v1209
    %1230 = vmatprep.subr.mxu0 0.0
    %1231 = vmatpush1.msra.mxu0 %v1210
    %1232 = vmatprep.subr.mxu0 0.0
    %1233 = vmatpush1.msra.mxu0 %v1211
    %1234 = vmatprep.subr.mxu0 0.0
    %1235 = vmatpush1.msra.mxu0 %v1212
    %1236 = vmatprep.subr.mxu0 0.0
    %1237 = vmatpush1.msra.mxu0 %v1213
    %1238 = vmatprep.subr.mxu0 0.0
    %1239 = vmatpush1.msra.mxu0 %v1214
    %1240 = vmatprep.subr.mxu0 0.0
    %1241 = vmatpush1.msra.mxu0 %v1215
    %1242 = vmatprep.subr.mxu0 0.0
    %1243 = vmatpush1.msra.mxu0 %v1216
    %1244 = vmatprep.subr.mxu0 0.0
    %1245 = vmatpush1.msra.mxu0 %v1217
    %1246 = vmatprep.subr.mxu0 0.0
    %1247 = vmatpush1.msra.mxu0 %v1218
    %1248 = vmatprep.subr.mxu0 0.0
    %1249 = vmatpush1.msra.mxu0 %v1219
    %1250 = vmatprep.subr.mxu0 0.0
    %1251 = vmatpush1.msra.mxu0 %v1220
    %1252 = vmatprep.subr.mxu0 0.0
    %1253 = vmatpush1.msra.mxu0 %v1221
    %1254 = vmatprep.subr.mxu0 0.0
    %1255 = vmatpush1.msra.mxu0 %v1222
    %1256 = vmatprep.subr.mxu0 0.0
    %1257 = vmatpush1.msra.mxu0 0.0
    %1258 = vmatprep.subr.mxu0 0.0
    %1259 = vmatpush1.msra.mxu0 0.0
    %1260 = vmatprep.subr.mxu0 0.0
    %1261 = vmatpush1.msra.mxu0 0.0
    %1262 = vmatprep.subr.mxu0 0.0
    %1263 = vmatpush1.msra.mxu0 0.0
    %1264 = vmatprep.subr.mxu0 0.0
    %1265 = vmatpush1.msra.mxu0 0.0
    %1266 = vmatprep.subr.mxu0 0.0
    %1267 = vmatpush1.msra.mxu0 0.0
    %1268 = vmatprep.subr.mxu0 0.0
    %1269 = vmatpush1.msra.mxu0 0.0
    %1270 = vmatprep.subr.mxu0 0.0
    %1271 = vmatpush1.msra.mxu0 0.0
    %1272 = vmatprep.subr.mxu0 0.0
    %1273 = vmatpush1.msra.mxu0 0.0
    %1274 = vmatprep.subr.mxu0 0.0
    %1275 = vmatpush1.msra.mxu0 0.0
    %1276 = vmatprep.subr.mxu0 0.0
    %1277 = vmatpush1.msra.mxu0 0.0
    %1278 = vmatprep.subr.mxu0 0.0
    %1279 = vmatpush1.msra.mxu0 0.0
    %1280 = vmatprep.subr.mxu0 0.0
    %1281 = vmatpush1.msra.mxu0 0.0
    %1282 = vmatprep.subr.mxu0 0.0
    %1283 = vmatpush1.msra.mxu0 0.0
    %1284 = vmatprep.subr.mxu0 0.0
    %1285 = vmatpush1.msra.mxu0 0.0
    %1286 = vmatprep.subr.mxu0 0.0
    %1287 = vmatpush1.msra.mxu0 0.0
    %1288 = vmatprep.mubr.f32.mxu0 0.0
    %1289 = vmatmul.mubr.f32.gmra.mrb[0].mxu0 %v1206
    %v1290 = vpop.f32.mrb[0].mxu0
    %v1291 = vadd.f32 %v1223, %v1290
    %v1292 = vpop.f32.mrb[0].mxu0
    %1293 = vdwg.mxu0
    %vm1294 = vcmask 155648
    %1295 = vst.msk [vmem:[%s2] sm:$0x1] %vm1294, %v1291
    // Predicated region
    $region14: #{forward.1} parent=1 // pred_check
      _
    $region15: #{forward.1} parent=1 // pred_check_branch
      %1297 = sbr.rel (0) target = $region17
    $region16: #{forward.1} parent=1 // pred_region
      _
    $region17: #{forward.1} parent=1 // pred_fallthru
      _
    // Predicated region
    $region18: #{forward.1} parent=1 // pred_check
      _
    $region19: #{forward.1} parent=1 // pred_check_branch
      %1299 = sbr.rel (0) target = $region21
    $region20: #{forward.1} parent=1 // pred_region
      _
    $region21: #{forward.1} parent=1 // pred_fallthru
      _
    %1300 = vsyncpa [#allocation5], 1

</llo_original>
